<compile_context>
chip_gen: v5e
topology: v5e:2x2
jax: 0.10.0
libtpu: 0.0.40
codegen_flags: <defaults>
</compile_context>

<pallas_src>
import functools

import numpy as np
import jax
import jax.numpy as jnp
from jax.experimental import pallas as pl
from jax.experimental.pallas import tpu as pltpu


# ----------------------------------------------------------------------------
# The fused Pallas kernel (single invocation, everything resident in VMEM)
# ----------------------------------------------------------------------------
def _fused_cnn_tcn_kernel(x_ref, m1_ref, h1_ref, m2_ref, h2_ref, wsel_ref,
                          bfc_ref, wt1_ref, bt1_ref, wt2_ref, bt2_ref,
                          o_ref, fpad_ref, *, B, T, H, W, K):
    """Whole CNN_TCN_block forward for all (batch, timestep) frames at once.

    x_ref   : (N=B*T, Cin*H*W)  frames, natural NCHW flatten (ci*H*W + y*W + x)
    m1_ref  : (Cin*H*W, C1*H*W) conv1 as dense 'same'-pad matrix, BN scale folded
    h1_ref  : (1, C1*H*W)       conv1 folded bias / BN shift (per channel, tiled)
    m2_ref  : (C1*H*W, C2*H*W)  conv2 as dense matrix (scale folded)
    h2_ref  : (1, C2*H*W)
    wsel_ref: (C2*H*W - maxoff, 64) pool-cell-selecting sparse FC weight
    bfc_ref : (1, 64)
    wt?_ref : (K, 64, 64)       TCN causal conv taps, layout [k, cin, cout]
    bt?_ref : (1, 64)
    o_ref   : (B, 64, T)        final output, already in (B, C, T) layout
    fpad_ref: (N + K - 1, 64)   VMEM scratch for causal row shifts
    """
    N = B * T

    # ---- CNN: two 'same' convs as lane-dense matmuls (bias / BN folded). ----
    a1 = jnp.dot(x_ref[...], m1_ref[...], preferred_element_type=jnp.float32)
    a1 = jnp.maximum(a1 + h1_ref[...], 0.0)                    # (N, C1*H*W)
    a2 = jnp.dot(a1, m2_ref[...], preferred_element_type=jnp.float32)
    a2 = jnp.maximum(a2 + h2_ref[...], 0.0)                    # (N, C2*H*W)

    # ---- AdaptiveMaxPool2d((4,4)) + channel-major flatten + Linear, fused. ----
    # Uniform (H//4, W//4) windows: window max = elementwise max of lane-shifted
    # slices; the selection of each (channel, cell) representative lane (and the
    # flatten order) is baked into the sparse wsel matrix, so pool+flatten+FC is
    # one matmul.  Non-representative lanes hold garbage but get zero weight.
    sy, sx = H // 4, W // 4
    offs = [dy * W + dx for dy in range(sy) for dx in range(sx)]
    L = wsel_ref.shape[0]                                       # == C2*H*W - max(offs)
    pm = a2[:, 0:L]
    for off in offs[1:]:
        pm = jnp.maximum(pm, a2[:, off:off + L])
    f = jnp.dot(pm, wsel_ref[...], preferred_element_type=jnp.float32)
    f = jnp.maximum(f + bfc_ref[...], 0.0)                      # (N, 64), row = b*T + t

    # ---- TCN single temporal block (2 causal convs, identity residual). ----
    Ct = wt1_ref.shape[2]
    t_idx = jax.lax.broadcasted_iota(jnp.int32, (N, 1), 0) % T  # time index per row

    if K > 1:                                                   # causal left pad rows
        fpad_ref[0:K - 1, :] = jnp.zeros((K - 1, Ct), jnp.float32)

    def causal_conv(w_ref, b_ref):
        # Per-tap dots on row-shifted views (review: no zero-fill/scatter patches).
        acc = jnp.zeros((N, Ct), jnp.float32)
        for k in range(K):
            s = K - 1 - k                       # how far back in time this tap looks
            v = fpad_ref[k:k + N, :]            # rows shifted down by s, zero head
            if s > 0:                           # kill cross-batch causal leakage
                v = jnp.where(t_idx >= s, v, 0.0)
            acc = acc + jnp.dot(v, w_ref[k], preferred_element_type=jnp.float32)
        return jnp.maximum(acc + b_ref[...], 0.0)

    fpad_ref[K - 1:K - 1 + N, :] = f
    y1 = causal_conv(wt1_ref, bt1_ref)
    fpad_ref[K - 1:K - 1 + N, :] = y1
    y2 = causal_conv(wt2_ref, bt2_ref)
    out = jnp.maximum(y2 + f, 0.0)                              # (N, Ct)

    # ---- Write (B, Ct, T) directly: transpose via identity dot on the MXU. ----
    ri = jax.lax.broadcasted_iota(jnp.int32, (N, N), 0)
    ci = jax.lax.broadcasted_iota(jnp.int32, (N, N), 1)
    eye = (ri == ci).astype(jnp.float32)
    out_t = jax.lax.dot_general(out, eye, (((0,), (0,)), ((), ())),
                                preferred_element_type=jnp.float32)   # (Ct, N)
    for b in range(B):
        o_ref[b] = out_t[:, b * T:(b + 1) * T]


# ----------------------------------------------------------------------------
# Parameter preparation (host-side, once): fold conv/BN/pool/flatten into dense
# matrices so the kernel is pure matmuls + elementwise ops.
# ----------------------------------------------------------------------------
def _conv_same_matrix(w, H, W, padding):
    """Dense M so that flat_out = flat_in @ M equals a 'same' 2-D conv.

    w: (Cout, Cin, kh, kw) (PyTorch conv2d layout).  flat_in lane = ci*H*W + y*W + x,
    flat_out lane = co*H*W + y*W + x.  Zero padding is encoded by simply omitting
    out-of-range taps.  Requires output spatial == input spatial.
    """
    Co, Ci, kh, kw = w.shape
    assert H + 2 * padding - kh + 1 == H and W + 2 * padding - kw + 1 == W, (
        "fused kernel supports 'same' convolutions only")
    P = H * W
    M = np.zeros((Ci * P, Co * P), np.float32)
    Mv = M.reshape(Ci, P, Co, P)
    for yo in range(H):
        for xo in range(W):
            qo = yo * W + xo
            for ky in range(kh):
                yi = yo + ky - padding
                if not 0 <= yi < H:
                    continue
                for kx in range(kw):
                    xi = xo + kx - padding
                    if not 0 <= xi < W:
                        continue
                    Mv[:, yi * W + xi, :, qo] = w[:, :, ky, kx].T
    return M


def prepare_params(raw, H, W, eps=1e-5):
    """Build the fused-kernel operands from PyTorch-style parameters (2 CNN layers)."""
    P = H * W
    mats, shifts = [], []
    for lyr in raw["cnn"]:
        w, b = lyr["w"], lyr["b"]                       # (Co, Ci, k, k), (Co,)
        M = _conv_same_matrix(w, H, W, lyr["padding"])
        if lyr["bn"] is not None:                       # eval-mode BatchNorm fold
            gamma, beta, mean, var = lyr["bn"]
            s = gamma / np.sqrt(var + eps)
            shift = s * (b - mean) + beta
        else:
            s = np.ones_like(b)
            shift = b
        mats.append((M * np.repeat(s, P)[None, :]).astype(np.float32))
        shifts.append(np.repeat(shift, P)[None, :].astype(np.float32))
    C2 = raw["cnn"][-1]["w"].shape[0]

    # AdaptiveMaxPool2d((4,4)) + torch.flatten + nn.Linear as one sparse matrix.
    assert H % 4 == 0 and W % 4 == 0
    sy, sx = H // 4, W // 4
    maxoff = (sy - 1) * W + (sx - 1)
    fc_w, fc_b = raw["fc_w"], raw["fc_b"]               # (16*C2, F) = fc.weight.T, (F,)
    F = fc_w.shape[1]
    assert fc_w.shape[0] == 16 * C2
    assert raw["tcn_w1"].shape[1] == F and raw["tcn_w2"].shape[2] == F, (
        "identity residual in the TCN block assumes in_channels == out_channels")
    wsel = np.zeros((C2 * P - maxoff, F), np.float32)
    for c in range(C2):
        for py in range(4):
            for px in range(4):
                lane = c * P + (sy * py) * W + (sx * px)
                wsel[lane, :] = fc_w[c * 16 + py * 4 + px, :]

    return dict(
        m1=jnp.asarray(mats[0]), h1=jnp.asarray(shifts[0]),
        m2=jnp.asarray(mats[1]), h2=jnp.asarray(shifts[1]),
        wsel=jnp.asarray(wsel),
        bfc=jnp.asarray(fc_b[None, :].astype(np.float32)),
        wt1=jnp.asarray(raw["tcn_w1"]), bt1=jnp.asarray(raw["tcn_b1"][None, :]),
        wt2=jnp.asarray(raw["tcn_w2"]), bt2=jnp.asarray(raw["tcn_b2"][None, :]),
    )


# ----------------------------------------------------------------------------
# Forward wrapper: one free reshape + one fused pallas_call.
# ----------------------------------------------------------------------------
def cnn_tcn_forward(x, prep, *, B, T, Cin, H, W, K):
    """x: (B, T, Cin, H, W) float32  ->  (B, 64, T)  (CNN_TCN_block.forward)."""
    N = B * T
    Ct = prep["wt2"].shape[-1]
    x2 = x.reshape(N, Cin * H * W)                      # contiguous, effectively free
    kern = functools.partial(_fused_cnn_tcn_kernel, B=B, T=T, H=H, W=W, K=K)
    return pl.pallas_call(
        kern,
        out_shape=jax.ShapeDtypeStruct((B, Ct, T), jnp.float32),
        scratch_shapes=[pltpu.VMEM((N + K - 1, Ct), jnp.float32)],
    )(x2, prep["m1"], prep["h1"], prep["m2"], prep["h2"], prep["wsel"],
      prep["bfc"], prep["wt1"], prep["bt1"], prep["wt2"], prep["bt2"])


# ----------------------------------------------------------------------------
# Deterministic parameter construction + run
# ----------------------------------------------------------------------------
if __name__ == "__main__":
    key = jax.random.PRNGKey(0)
    B, T, CIN, H, W = 2, 4, 3, 8, 8
    C1, C2 = 8, 8
    KCNN, PAD = 3, 1
    F_FC = 64                     # nn.Linear(4*4*out_channels[-1], 64)
    K_TCN = 3

    keys = jax.random.split(key, 12)

    def nrm(k, shape, scale):
        return (np.asarray(jax.random.normal(k, shape, jnp.float32)) * scale
                ).astype(np.float32)

    raw = dict(
        cnn=[
            dict(w=nrm(keys[0], (C1, CIN, KCNN, KCNN), 0.1),
                 b=nrm(keys[1], (C1,), 0.1),
                 bn=(np.ones(C1, np.float32), np.zeros(C1, np.float32),
                     np.zeros(C1, np.float32), np.ones(C1, np.float32)),
                 padding=PAD),
            dict(w=nrm(keys[2], (C2, C1, KCNN, KCNN), 0.1),
                 b=nrm(keys[3], (C2,), 0.1),
                 bn=None, padding=PAD),
        ],
        # fc_w is (in_features, out_features) == PyTorch fc.weight.T, in-features
        # ordered channel-major (c*16 + py*4 + px) as produced by torch.flatten.
        fc_w=nrm(keys[4], (4 * 4 * C2, F_FC), 0.05),
        fc_b=nrm(keys[5], (F_FC,), 0.05),
        # TCN taps stored as [k, cin, cout] (== PyTorch conv1d weight[co, ci, k]).
        tcn_w1=nrm(keys[6], (K_TCN, F_FC, F_FC), 0.05),
        tcn_b1=nrm(keys[7], (F_FC,), 0.05),
        tcn_w2=nrm(keys[8], (K_TCN, F_FC, F_FC), 0.05),
        tcn_b2=nrm(keys[9], (F_FC,), 0.05),
    )
    prep = prepare_params(raw, H, W)

    x = jax.random.normal(keys[10], (B, T, CIN, H, W), jnp.float32)

    fwd = jax.jit(functools.partial(cnn_tcn_forward,
                                    B=B, T=T, Cin=CIN, H=H, W=W, K=K_TCN))
    out = jax.block_until_ready(fwd(x, prep))
    assert out.shape == (B, F_FC, T), out.shape
    assert bool(jnp.all(jnp.isfinite(out)))
    print("KERNEL_OK")
</pallas_src>

<mosaic_0001>
module attributes {stable_mosaic.version = 11 : i64} {
  func.func @_fused_cnn_tcn_kernel(%arg0: memref<8x192xf32, #tpu.memory_space<vmem>>, %arg1: memref<192x512xf32, #tpu.memory_space<vmem>>, %arg2: memref<1x512xf32, #tpu.memory_space<vmem>>, %arg3: memref<512x512xf32, #tpu.memory_space<vmem>>, %arg4: memref<1x512xf32, #tpu.memory_space<vmem>>, %arg5: memref<503x64xf32, #tpu.memory_space<vmem>>, %arg6: memref<1x64xf32, #tpu.memory_space<vmem>>, %arg7: memref<3x64x64xf32, #tpu.memory_space<vmem>>, %arg8: memref<1x64xf32, #tpu.memory_space<vmem>>, %arg9: memref<3x64x64xf32, #tpu.memory_space<vmem>>, %arg10: memref<1x64xf32, #tpu.memory_space<vmem>>, %arg11: memref<2x64x4xf32, #tpu.memory_space<vmem>>, %arg12: memref<10x64xf32, #tpu.memory_space<vmem>>) attributes {dimension_semantics = [], scalar_prefetch = 0 : i64, scratch_operands = 1 : i64, tpu.core_type = #tpu.core_type<tc>} {
    %c0 = arith.constant 0 : index
    %c0_0 = arith.constant 0 : index
    %0 = vector.load %arg0[%c0, %c0_0] : memref<8x192xf32, #tpu.memory_space<vmem>>, vector<8x192xf32>
    %c0_1 = arith.constant 0 : index
    %c0_2 = arith.constant 0 : index
    %1 = vector.load %arg1[%c0_1, %c0_2] : memref<192x512xf32, #tpu.memory_space<vmem>>, vector<192x512xf32>
    %cst = arith.constant dense<0.000000e+00> : vector<8x512xf32>
    %2 = tpu.matmul %0, %1, %cst {dimension_numbers = #tpu.dot_dimension_numbers<[1], [0], [0], [1], [0, 0, 1, 1], [], []>} : vector<8x192xf32>, vector<192x512xf32>, vector<8x512xf32> -> vector<8x512xf32>
    %c0_3 = arith.constant 0 : index
    %c0_4 = arith.constant 0 : index
    %3 = vector.load %arg2[%c0_3, %c0_4] : memref<1x512xf32, #tpu.memory_space<vmem>>, vector<1x512xf32>
    %4 = vector.broadcast %3 : vector<1x512xf32> to vector<8x512xf32>
    %5 = arith.addf %2, %4 : vector<8x512xf32>
    %cst_5 = arith.constant 0.000000e+00 : f32
    %6 = vector.broadcast %cst_5 : f32 to vector<8x512xf32>
    %7 = arith.maximumf %5, %6 : vector<8x512xf32>
    %c0_6 = arith.constant 0 : index
    %c0_7 = arith.constant 0 : index
    %8 = vector.load %arg3[%c0_6, %c0_7] : memref<512x512xf32, #tpu.memory_space<vmem>>, vector<512x512xf32>
    %cst_8 = arith.constant dense<0.000000e+00> : vector<8x512xf32>
    %9 = tpu.matmul %7, %8, %cst_8 {dimension_numbers = #tpu.dot_dimension_numbers<[1], [0], [0], [1], [0, 0, 1, 1], [], []>} : vector<8x512xf32>, vector<512x512xf32>, vector<8x512xf32> -> vector<8x512xf32>
    %c0_9 = arith.constant 0 : index
    %c0_10 = arith.constant 0 : index
    %10 = vector.load %arg4[%c0_9, %c0_10] : memref<1x512xf32, #tpu.memory_space<vmem>>, vector<1x512xf32>
    %11 = vector.broadcast %10 : vector<1x512xf32> to vector<8x512xf32>
    %12 = arith.addf %9, %11 : vector<8x512xf32>
    %cst_11 = arith.constant 0.000000e+00 : f32
    %13 = vector.broadcast %cst_11 : f32 to vector<8x512xf32>
    %14 = arith.maximumf %12, %13 : vector<8x512xf32>
    %15 = vector.extract_strided_slice %14 {offsets = [0, 0], sizes = [8, 503], strides = [1, 1]} : vector<8x512xf32> to vector<8x503xf32>
    %16 = vector.extract_strided_slice %14 {offsets = [0, 1], sizes = [8, 503], strides = [1, 1]} : vector<8x512xf32> to vector<8x503xf32>
    %17 = arith.maximumf %15, %16 : vector<8x503xf32>
    %18 = vector.extract_strided_slice %14 {offsets = [0, 8], sizes = [8, 503], strides = [1, 1]} : vector<8x512xf32> to vector<8x503xf32>
    %19 = arith.maximumf %17, %18 : vector<8x503xf32>
    %20 = vector.extract_strided_slice %14 {offsets = [0, 9], sizes = [8, 503], strides = [1, 1]} : vector<8x512xf32> to vector<8x503xf32>
    %21 = arith.maximumf %19, %20 : vector<8x503xf32>
    %c0_12 = arith.constant 0 : index
    %c0_13 = arith.constant 0 : index
    %22 = vector.load %arg5[%c0_12, %c0_13] : memref<503x64xf32, #tpu.memory_space<vmem>>, vector<503x64xf32>
    %cst_14 = arith.constant dense<0.000000e+00> : vector<8x64xf32>
    %23 = tpu.matmul %21, %22, %cst_14 {dimension_numbers = #tpu.dot_dimension_numbers<[1], [0], [0], [1], [0, 0, 1, 1], [], []>} : vector<8x503xf32>, vector<503x64xf32>, vector<8x64xf32> -> vector<8x64xf32>
    %c0_15 = arith.constant 0 : index
    %c0_16 = arith.constant 0 : index
    %24 = vector.load %arg6[%c0_15, %c0_16] : memref<1x64xf32, #tpu.memory_space<vmem>>, vector<1x64xf32>
    %25 = vector.broadcast %24 : vector<1x64xf32> to vector<8x64xf32>
    %26 = arith.addf %23, %25 : vector<8x64xf32>
    %cst_17 = arith.constant 0.000000e+00 : f32
    %27 = vector.broadcast %cst_17 : f32 to vector<8x64xf32>
    %28 = arith.maximumf %26, %27 : vector<8x64xf32>
    %29 = tpu.iota {dimensions = array<i32: 0>} : vector<8x1xi32>
    %c4_i32 = arith.constant 4 : i32
    %c0_i32 = arith.constant 0 : i32
    %30 = arith.cmpi eq, %c4_i32, %c0_i32 : i32
    %c1_i32 = arith.constant 1 : i32
    %31 = arith.select %30, %c1_i32, %c4_i32 : i32
    %32 = vector.broadcast %31 : i32 to vector<8x1xi32>
    %33 = arith.remsi %29, %32 : vector<8x1xi32>
    %c0_i32_18 = arith.constant 0 : i32
    %34 = vector.broadcast %c0_i32_18 : i32 to vector<8x1xi32>
    %35 = arith.cmpi ne, %33, %34 : vector<8x1xi32>
    %c0_i32_19 = arith.constant 0 : i32
    %36 = vector.broadcast %c0_i32_19 : i32 to vector<8x1xi32>
    %37 = arith.cmpi slt, %33, %36 : vector<8x1xi32>
    %c0_i32_20 = arith.constant 0 : i32
    %38 = arith.cmpi slt, %31, %c0_i32_20 : i32
    %39 = vector.broadcast %38 : i1 to vector<8x1xi1>
    %40 = vector.broadcast %39 : vector<8x1xi1> to vector<8x1xi1>
    %41 = arith.xori %37, %40 : vector<8x1xi1>
    %42 = arith.andi %41, %35 : vector<8x1xi1>
    %43 = vector.broadcast %31 : i32 to vector<8x1xi32>
    %44 = arith.addi %33, %43 : vector<8x1xi32>
    %45 = arith.select %42, %44, %33 : vector<8x1xi1>, vector<8x1xi32>
    %cst_21 = arith.constant 0.000000e+00 : f32
    %46 = vector.broadcast %cst_21 : f32 to vector<2x64xf32>
    %c0_22 = arith.constant 0 : index
    %c0_23 = arith.constant 0 : index
    %47 = vector.load %arg12[%c0_22, %c0_23] : memref<10x64xf32, #tpu.memory_space<vmem>>, vector<2x64xf32>
    tpu.vector_store %arg12[%c0_22, %c0_23], %46 {strides = array<i32>} : memref<10x64xf32, #tpu.memory_space<vmem>>, vector<2x64xf32>,
    %c2 = arith.constant 2 : index
    %c0_24 = arith.constant 0 : index
    %48 = vector.load %arg12[%c2, %c0_24] : memref<10x64xf32, #tpu.memory_space<vmem>>, vector<8x64xf32>
    tpu.vector_store %arg12[%c2, %c0_24], %28 {strides = array<i32>} : memref<10x64xf32, #tpu.memory_space<vmem>>, vector<8x64xf32>,
    %cst_25 = arith.constant 0.000000e+00 : f32
    %49 = vector.broadcast %cst_25 : f32 to vector<8x64xf32>
    %c0_26 = arith.constant 0 : index
    %c0_27 = arith.constant 0 : index
    %50 = vector.load %arg12[%c0_26, %c0_27] : memref<10x64xf32, #tpu.memory_space<vmem>>, vector<8x64xf32>
    %c2_i32 = arith.constant 2 : i32
    %51 = vector.broadcast %c2_i32 : i32 to vector<8x1xi32>
    %52 = arith.cmpi sge, %45, %51 : vector<8x1xi32>
    %cst_28 = arith.constant 0.000000e+00 : f32
    %53 = vector.shape_cast %52 : vector<8x1xi1> to vector<8x1xi1>
    %54 = vector.broadcast %53 : vector<8x1xi1> to vector<8x64xi1>
    %55 = vector.broadcast %cst_28 : f32 to vector<8x64xf32>
    %56 = arith.select %54, %50, %55 : vector<8x64xi1>, vector<8x64xf32>
    %c0_29 = arith.constant 0 : index
    %c0_30 = arith.constant 0 : index
    %c0_31 = arith.constant 0 : index
    %57 = vector.load %arg7[%c0_29, %c0_30, %c0_31] : memref<3x64x64xf32, #tpu.memory_space<vmem>>, vector<1x64x64xf32>
    %58 = vector.shape_cast %57 : vector<1x64x64xf32> to vector<64x64xf32>
    %cst_32 = arith.constant dense<0.000000e+00> : vector<8x64xf32>
    %59 = tpu.matmul %56, %58, %cst_32 {dimension_numbers = #tpu.dot_dimension_numbers<[1], [0], [0], [1], [0, 0, 1, 1], [], []>} : vector<8x64xf32>, vector<64x64xf32>, vector<8x64xf32> -> vector<8x64xf32>
    %60 = arith.addf %49, %59 : vector<8x64xf32>
    %c1 = arith.constant 1 : index
    %c0_33 = arith.constant 0 : index
    %61 = vector.load %arg12[%c1, %c0_33] : memref<10x64xf32, #tpu.memory_space<vmem>>, vector<8x64xf32>
    %c1_i32_34 = arith.constant 1 : i32
    %62 = vector.broadcast %c1_i32_34 : i32 to vector<8x1xi32>
    %63 = arith.cmpi sge, %45, %62 : vector<8x1xi32>
    %cst_35 = arith.constant 0.000000e+00 : f32
    %64 = vector.shape_cast %63 : vector<8x1xi1> to vector<8x1xi1>
    %65 = vector.broadcast %64 : vector<8x1xi1> to vector<8x64xi1>
    %66 = vector.broadcast %cst_35 : f32 to vector<8x64xf32>
    %67 = arith.select %65, %61, %66 : vector<8x64xi1>, vector<8x64xf32>
    %c1_36 = arith.constant 1 : index
    %c0_37 = arith.constant 0 : index
    %c0_38 = arith.constant 0 : index
    %68 = vector.load %arg7[%c1_36, %c0_37, %c0_38] : memref<3x64x64xf32, #tpu.memory_space<vmem>>, vector<1x64x64xf32>
    %69 = vector.shape_cast %68 : vector<1x64x64xf32> to vector<64x64xf32>
    %cst_39 = arith.constant dense<0.000000e+00> : vector<8x64xf32>
    %70 = tpu.matmul %67, %69, %cst_39 {dimension_numbers = #tpu.dot_dimension_numbers<[1], [0], [0], [1], [0, 0, 1, 1], [], []>} : vector<8x64xf32>, vector<64x64xf32>, vector<8x64xf32> -> vector<8x64xf32>
    %71 = arith.addf %60, %70 : vector<8x64xf32>
    %c2_40 = arith.constant 2 : index
    %c0_41 = arith.constant 0 : index
    %72 = vector.load %arg12[%c2_40, %c0_41] : memref<10x64xf32, #tpu.memory_space<vmem>>, vector<8x64xf32>
    %c2_42 = arith.constant 2 : index
    %c0_43 = arith.constant 0 : index
    %c0_44 = arith.constant 0 : index
    %73 = vector.load %arg7[%c2_42, %c0_43, %c0_44] : memref<3x64x64xf32, #tpu.memory_space<vmem>>, vector<1x64x64xf32>
    %74 = vector.shape_cast %73 : vector<1x64x64xf32> to vector<64x64xf32>
    %cst_45 = arith.constant dense<0.000000e+00> : vector<8x64xf32>
    %75 = tpu.matmul %72, %74, %cst_45 {dimension_numbers = #tpu.dot_dimension_numbers<[1], [0], [0], [1], [0, 0, 1, 1], [], []>} : vector<8x64xf32>, vector<64x64xf32>, vector<8x64xf32> -> vector<8x64xf32>
    %76 = arith.addf %71, %75 : vector<8x64xf32>
    %c0_46 = arith.constant 0 : index
    %c0_47 = arith.constant 0 : index
    %77 = vector.load %arg8[%c0_46, %c0_47] : memref<1x64xf32, #tpu.memory_space<vmem>>, vector<1x64xf32>
    %78 = vector.broadcast %77 : vector<1x64xf32> to vector<8x64xf32>
    %79 = arith.addf %76, %78 : vector<8x64xf32>
    %cst_48 = arith.constant 0.000000e+00 : f32
    %80 = vector.broadcast %cst_48 : f32 to vector<8x64xf32>
    %81 = arith.maximumf %79, %80 : vector<8x64xf32>
    %c2_49 = arith.constant 2 : index
    %c0_50 = arith.constant 0 : index
    %82 = vector.load %arg12[%c2_49, %c0_50] : memref<10x64xf32, #tpu.memory_space<vmem>>, vector<8x64xf32>
    tpu.vector_store %arg12[%c2_49, %c0_50], %81 {strides = array<i32>} : memref<10x64xf32, #tpu.memory_space<vmem>>, vector<8x64xf32>,
    %cst_51 = arith.constant 0.000000e+00 : f32
    %83 = vector.broadcast %cst_51 : f32 to vector<8x64xf32>
    %c0_52 = arith.constant 0 : index
    %c0_53 = arith.constant 0 : index
    %84 = vector.load %arg12[%c0_52, %c0_53] : memref<10x64xf32, #tpu.memory_space<vmem>>, vector<8x64xf32>
    %c2_i32_54 = arith.constant 2 : i32
    %85 = vector.broadcast %c2_i32_54 : i32 to vector<8x1xi32>
    %86 = arith.cmpi sge, %45, %85 : vector<8x1xi32>
    %cst_55 = arith.constant 0.000000e+00 : f32
    %87 = vector.shape_cast %86 : vector<8x1xi1> to vector<8x1xi1>
    %88 = vector.broadcast %87 : vector<8x1xi1> to vector<8x64xi1>
    %89 = vector.broadcast %cst_55 : f32 to vector<8x64xf32>
    %90 = arith.select %88, %84, %89 : vector<8x64xi1>, vector<8x64xf32>
    %c0_56 = arith.constant 0 : index
    %c0_57 = arith.constant 0 : index
    %c0_58 = arith.constant 0 : index
    %91 = vector.load %arg9[%c0_56, %c0_57, %c0_58] : memref<3x64x64xf32, #tpu.memory_space<vmem>>, vector<1x64x64xf32>
    %92 = vector.shape_cast %91 : vector<1x64x64xf32> to vector<64x64xf32>
    %cst_59 = arith.constant dense<0.000000e+00> : vector<8x64xf32>
    %93 = tpu.matmul %90, %92, %cst_59 {dimension_numbers = #tpu.dot_dimension_numbers<[1], [0], [0], [1], [0, 0, 1, 1], [], []>} : vector<8x64xf32>, vector<64x64xf32>, vector<8x64xf32> -> vector<8x64xf32>
    %94 = arith.addf %83, %93 : vector<8x64xf32>
    %c1_60 = arith.constant 1 : index
    %c0_61 = arith.constant 0 : index
    %95 = vector.load %arg12[%c1_60, %c0_61] : memref<10x64xf32, #tpu.memory_space<vmem>>, vector<8x64xf32>
    %c1_i32_62 = arith.constant 1 : i32
    %96 = vector.broadcast %c1_i32_62 : i32 to vector<8x1xi32>
    %97 = arith.cmpi sge, %45, %96 : vector<8x1xi32>
    %cst_63 = arith.constant 0.000000e+00 : f32
    %98 = vector.shape_cast %97 : vector<8x1xi1> to vector<8x1xi1>
    %99 = vector.broadcast %98 : vector<8x1xi1> to vector<8x64xi1>
    %100 = vector.broadcast %cst_63 : f32 to vector<8x64xf32>
    %101 = arith.select %99, %95, %100 : vector<8x64xi1>, vector<8x64xf32>
    %c1_64 = arith.constant 1 : index
    %c0_65 = arith.constant 0 : index
    %c0_66 = arith.constant 0 : index
    %102 = vector.load %arg9[%c1_64, %c0_65, %c0_66] : memref<3x64x64xf32, #tpu.memory_space<vmem>>, vector<1x64x64xf32>
    %103 = vector.shape_cast %102 : vector<1x64x64xf32> to vector<64x64xf32>
    %cst_67 = arith.constant dense<0.000000e+00> : vector<8x64xf32>
    %104 = tpu.matmul %101, %103, %cst_67 {dimension_numbers = #tpu.dot_dimension_numbers<[1], [0], [0], [1], [0, 0, 1, 1], [], []>} : vector<8x64xf32>, vector<64x64xf32>, vector<8x64xf32> -> vector<8x64xf32>
    %105 = arith.addf %94, %104 : vector<8x64xf32>
    %c2_68 = arith.constant 2 : index
    %c0_69 = arith.constant 0 : index
    %106 = vector.load %arg12[%c2_68, %c0_69] : memref<10x64xf32, #tpu.memory_space<vmem>>, vector<8x64xf32>
    %c2_70 = arith.constant 2 : index
    %c0_71 = arith.constant 0 : index
    %c0_72 = arith.constant 0 : index
    %107 = vector.load %arg9[%c2_70, %c0_71, %c0_72] : memref<3x64x64xf32, #tpu.memory_space<vmem>>, vector<1x64x64xf32>
    %108 = vector.shape_cast %107 : vector<1x64x64xf32> to vector<64x64xf32>
    %cst_73 = arith.constant dense<0.000000e+00> : vector<8x64xf32>
    %109 = tpu.matmul %106, %108, %cst_73 {dimension_numbers = #tpu.dot_dimension_numbers<[1], [0], [0], [1], [0, 0, 1, 1], [], []>} : vector<8x64xf32>, vector<64x64xf32>, vector<8x64xf32> -> vector<8x64xf32>
    %110 = arith.addf %105, %109 : vector<8x64xf32>
    %c0_74 = arith.constant 0 : index
    %c0_75 = arith.constant 0 : index
    %111 = vector.load %arg10[%c0_74, %c0_75] : memref<1x64xf32, #tpu.memory_space<vmem>>, vector<1x64xf32>
    %112 = vector.broadcast %111 : vector<1x64xf32> to vector<8x64xf32>
    %113 = arith.addf %110, %112 : vector<8x64xf32>
    %cst_76 = arith.constant 0.000000e+00 : f32
    %114 = vector.broadcast %cst_76 : f32 to vector<8x64xf32>
    %115 = arith.maximumf %113, %114 : vector<8x64xf32>
    %116 = arith.addf %115, %28 : vector<8x64xf32>
    %cst_77 = arith.constant 0.000000e+00 : f32
    %117 = vector.broadcast %cst_77 : f32 to vector<8x64xf32>
    %118 = arith.maximumf %116, %117 : vector<8x64xf32>
    %119 = tpu.iota {dimensions = array<i32: 0>} : vector<8x8xi32>
    %120 = tpu.iota {dimensions = array<i32: 1>} : vector<8x8xi32>
    %121 = arith.cmpi eq, %119, %120 : vector<8x8xi32>
    %122 = arith.extui %121 : vector<8x8xi1> to vector<8x8xi32>
    %123 = arith.sitofp %122 : vector<8x8xi32> to vector<8x8xf32>
    %cst_78 = arith.constant dense<0.000000e+00> : vector<64x8xf32>
    %124 = tpu.matmul %118, %123, %cst_78 {dimension_numbers = #tpu.dot_dimension_numbers<[0], [0], [1], [1], [0, 1, 1, 1], [], []>} : vector<8x64xf32>, vector<8x8xf32>, vector<64x8xf32> -> vector<64x8xf32>
    %125 = vector.extract_strided_slice %124 {offsets = [0, 0], sizes = [64, 4], strides = [1, 1]} : vector<64x8xf32> to vector<64x4xf32>
    %c0_79 = arith.constant 0 : index
    %c0_80 = arith.constant 0 : index
    %c0_81 = arith.constant 0 : index
    %126 = vector.load %arg11[%c0_79, %c0_80, %c0_81] : memref<2x64x4xf32, #tpu.memory_space<vmem>>, vector<1x64x4xf32>
    %127 = vector.shape_cast %126 : vector<1x64x4xf32> to vector<64x4xf32>
    %128 = vector.shape_cast %125 : vector<64x4xf32> to vector<1x64x4xf32>
    tpu.vector_store %arg11[%c0_79, %c0_80, %c0_81], %128 {strides = array<i32>} : memref<2x64x4xf32, #tpu.memory_space<vmem>>, vector<1x64x4xf32>,
    %129 = vector.extract_strided_slice %124 {offsets = [0, 4], sizes = [64, 4], strides = [1, 1]} : vector<64x8xf32> to vector<64x4xf32>
    %c1_82 = arith.constant 1 : index
    %c0_83 = arith.constant 0 : index
    %c0_84 = arith.constant 0 : index
    %130 = vector.load %arg11[%c1_82, %c0_83, %c0_84] : memref<2x64x4xf32, #tpu.memory_space<vmem>>, vector<1x64x4xf32>
    %131 = vector.shape_cast %130 : vector<1x64x4xf32> to vector<64x4xf32>
    %132 = vector.shape_cast %129 : vector<64x4xf32> to vector<1x64x4xf32>
    tpu.vector_store %arg11[%c1_82, %c0_83, %c0_84], %132 {strides = array<i32>} : memref<2x64x4xf32, #tpu.memory_space<vmem>>, vector<1x64x4xf32>,
    return
  }
}

</mosaic_0001>

<llo_original>
// kernel: cnn_tcn_forward.1
$region0: #{cnn_tcn_forward.1}
  #allocation0 [shape = 'u32[]', space=smem, size = 0x4, offset = 0x4, fixed_abs, tag = 'smem constant byte address 0x4 - core index']
  #allocation1 [shape = 'u32[72,128]{1,0:T(1,128)}', space=vmem, size = 0x9000, scoped, tag = 'internal scratch']
  #allocation2 [shape = 'f32[10,64]{1,0:T(8,128)}', space=vmem, size = 0x2000, scoped, tag = 'scratch operand']
  %s0 = inlined_call_operand.vmem [shape: f32[8,192], index: 0, kind: input, shape index: {}]
  %s1 = inlined_call_operand.vmem [shape: f32[192,512], index: 1, kind: input, shape index: {}]
  %s2 = inlined_call_operand.vmem [shape: f32[1,512], index: 2, kind: input, shape index: {}]
  %s3 = inlined_call_operand.hbm [shape: f32[512,512], index: 3, kind: input, shape index: {}]
  %s4 = inlined_call_operand.vmem [shape: f32[1,512], index: 4, kind: input, shape index: {}]
  %s5 = inlined_call_operand.vmem [shape: f32[503,64], index: 5, kind: input, shape index: {}]
  %s6 = inlined_call_operand.vmem [shape: f32[1,64], index: 6, kind: input, shape index: {}]
  %s7 = inlined_call_operand.vmem [shape: f32[3,64,64], index: 7, kind: input, shape index: {}]
  %s8 = inlined_call_operand.vmem [shape: f32[1,64], index: 8, kind: input, shape index: {}]
  %s9 = inlined_call_operand.hbm [shape: f32[3,64,64], index: 9, kind: input, shape index: {}]
  %s10 = inlined_call_operand.vmem [shape: f32[1,64], index: 10, kind: input, shape index: {}]
  %s11 = inlined_call_operand.vmem [shape: f32[2,64,4], index: 11, kind: output, shape index: {}]
  %s12 = sld [smem:[#allocation0]]
  $region62: #{cnn_tcn_forward.1} parent=0
    _
  %s14 = ssub.s32 1, %s12
  %s15 = scalar_select 0, %s14, %s12
  $region1: #{cnn_tcn_forward.1} parent=0
    #allocation3 [shape = 'u8[1048576]{0}', space=vmem, size = 0x100000, scoped, tag = 'input window, operand 3, single buffered']
    #allocation4 [shape = 's32[1]{0}', space=sflag, size = 0x4, scoped, tag = 'scoped memory for cnn_tcn_forward.1']
    #allocation5 [shape = 'u8[98304]{0}', space=vmem, size = 0x18000, scoped, tag = 'input window, operand 9, single buffered']
    #allocation6 [shape = 's32[1]{0}', space=sflag, size = 0x4, scoped, tag = 'scoped memory for cnn_tcn_forward.1']
    %16 = vsyncpa [#allocation4], 0
    %17 = vsyncpa [#allocation6], 0
    // Predicated region
    $region2: #{cnn_tcn_forward.1} parent=1 // pred_check
      _
    $region3: #{cnn_tcn_forward.1} parent=1 // pred_check_branch
      %19 = sbr.rel (0) target = $region5
    $region4: #{cnn_tcn_forward.1} parent=1 // pred_region
      _
    $region5: #{cnn_tcn_forward.1} parent=1 // pred_fallthru
      _
    // Predicated region
    $region6: #{cnn_tcn_forward.1} parent=1 // pred_check
      _
    $region7: #{cnn_tcn_forward.1} parent=1 // pred_check_branch
      %21 = sbr.rel (0) target = $region9
    $region8: #{cnn_tcn_forward.1} parent=1 // pred_region
      _
    $region9: #{cnn_tcn_forward.1} parent=1 // pred_fallthru
      _
    // Predicated region
    $region10: #{cnn_tcn_forward.1} parent=1 // pred_check
      _
    $region11: #{cnn_tcn_forward.1} parent=1 // pred_check_branch
      %23 = sbr.rel (0) target = $region13
    $region12: #{cnn_tcn_forward.1} parent=1 // pred_region
      _
    $region13: #{cnn_tcn_forward.1} parent=1 // pred_fallthru
      _
    // Predicated region
    $region14: #{cnn_tcn_forward.1} parent=1 // pred_check
      _
    $region15: #{cnn_tcn_forward.1} parent=1 // pred_check_branch
      %25 = sbr.rel (0) target = $region17
    $region16: #{cnn_tcn_forward.1} parent=1 // pred_region
      %27 = vsyncadd [#allocation4], 0
      %s28 = sshll.u32 %s3, 4
      %s29 = int_to_ptr.hbm [resolvable:$true] %s28
      %s30 = sshll.u32 [#allocation3], 4
      %s31 = int_to_ptr.vmem [resolvable:$true] %s30
      %36 = dma.hbm_to_vmem [thread:$0]  %s29, 32768, %s31, [#allocation4], 512, 512, 32
    $region17: #{cnn_tcn_forward.1} parent=1 // pred_fallthru
      _
    // Predicated region
    $region18: #{cnn_tcn_forward.1} parent=1 // pred_check
      _
    $region19: #{cnn_tcn_forward.1} parent=1 // pred_check_branch
      %38 = sbr.rel (0) target = $region21
    $region20: #{cnn_tcn_forward.1} parent=1 // pred_region
      _
    $region21: #{cnn_tcn_forward.1} parent=1 // pred_fallthru
      _
    // Predicated region
    $region22: #{cnn_tcn_forward.1} parent=1 // pred_check
      _
    $region23: #{cnn_tcn_forward.1} parent=1 // pred_check_branch
      %40 = sbr.rel (0) target = $region25
    $region24: #{cnn_tcn_forward.1} parent=1 // pred_region
      _
    $region25: #{cnn_tcn_forward.1} parent=1 // pred_fallthru
      _
    // Predicated region
    $region26: #{cnn_tcn_forward.1} parent=1 // pred_check
      _
    $region27: #{cnn_tcn_forward.1} parent=1 // pred_check_branch
      %42 = sbr.rel (0) target = $region29
    $region28: #{cnn_tcn_forward.1} parent=1 // pred_region
      _
    $region29: #{cnn_tcn_forward.1} parent=1 // pred_fallthru
      _
    // Predicated region
    $region30: #{cnn_tcn_forward.1} parent=1 // pred_check
      _
    $region31: #{cnn_tcn_forward.1} parent=1 // pred_check_branch
      %44 = sbr.rel (0) target = $region33
    $region32: #{cnn_tcn_forward.1} parent=1 // pred_region
      _
    $region33: #{cnn_tcn_forward.1} parent=1 // pred_fallthru
      _
    // Predicated region
    $region34: #{cnn_tcn_forward.1} parent=1 // pred_check
      _
    $region35: #{cnn_tcn_forward.1} parent=1 // pred_check_branch
      %46 = sbr.rel (0) target = $region37
    $region36: #{cnn_tcn_forward.1} parent=1 // pred_region
      _
    $region37: #{cnn_tcn_forward.1} parent=1 // pred_fallthru
      _
    // Predicated region
    $region38: #{cnn_tcn_forward.1} parent=1 // pred_check
      _
    $region39: #{cnn_tcn_forward.1} parent=1 // pred_check_branch
      %48 = sbr.rel (0) target = $region41
    $region40: #{cnn_tcn_forward.1} parent=1 // pred_region
      %50 = vsyncadd [#allocation6], 0
      %s51 = sshll.u32 %s9, 4
      %s52 = int_to_ptr.hbm [resolvable:$true] %s51
      %s53 = sshll.u32 [#allocation5], 4
      %s54 = int_to_ptr.vmem [resolvable:$true] %s53
      %59 = dma.hbm_to_vmem [thread:$0]  %s52, 3072, %s54, [#allocation6], 128, 128, 8
    $region41: #{cnn_tcn_forward.1} parent=1 // pred_fallthru
      _
    // Predicated region
    $region42: #{cnn_tcn_forward.1} parent=1 // pred_check
      _
    $region43: #{cnn_tcn_forward.1} parent=1 // pred_check_branch
      %61 = sbr.rel (0) target = $region45
    $region44: #{cnn_tcn_forward.1} parent=1 // pred_region
      _
    $region45: #{cnn_tcn_forward.1} parent=1 // pred_fallthru
      _
    // Predicated region
    $region46: #{cnn_tcn_forward.1} parent=1 // pred_check
      _
    $region47: #{cnn_tcn_forward.1} parent=1 // pred_check_branch
      %63 = sbr.rel (0) target = $region49
    $region48: #{cnn_tcn_forward.1} parent=1 // pred_region
      %65 = dma.done [#allocation4], 32768
    $region49: #{cnn_tcn_forward.1} parent=1 // pred_fallthru
      _
    // Predicated region
    $region50: #{cnn_tcn_forward.1} parent=1 // pred_check
      _
    $region51: #{cnn_tcn_forward.1} parent=1 // pred_check_branch
      %67 = sbr.rel (0) target = $region53
    $region52: #{cnn_tcn_forward.1} parent=1 // pred_region
      %69 = dma.done [#allocation6], 3072
    $region53: #{cnn_tcn_forward.1} parent=1 // pred_fallthru
      _
    %v70 = vld [vmem:[%s0] sm:$0xff]
    %v71 = vld [vmem:[%s0 + $0x8] sm:$0xff]
    %v72 = vld [vmem:[%s1] sm:$0xff]
    %v73 = vld [vmem:[%s1 + $0x8] sm:$0xff]
    %v74 = vld [vmem:[%s1 + $0x10] sm:$0xff]
    %v75 = vld [vmem:[%s1 + $0x18] sm:$0xff]
    %v76 = vld [vmem:[%s1 + $0x20] sm:$0xff]
    %v77 = vld [vmem:[%s1 + $0x28] sm:$0xff]
    %v78 = vld [vmem:[%s1 + $0x30] sm:$0xff]
    %v79 = vld [vmem:[%s1 + $0x38] sm:$0xff]
    %v80 = vld [vmem:[%s1 + $0x40] sm:$0xff]
    %v81 = vld [vmem:[%s1 + $0x48] sm:$0xff]
    %v82 = vld [vmem:[%s1 + $0x50] sm:$0xff]
    %v83 = vld [vmem:[%s1 + $0x58] sm:$0xff]
    %v84 = vld [vmem:[%s1 + $0x60] sm:$0xff]
    %v85 = vld [vmem:[%s1 + $0x68] sm:$0xff]
    %v86 = vld [vmem:[%s1 + $0x70] sm:$0xff]
    %v87 = vld [vmem:[%s1 + $0x78] sm:$0xff]
    %v88 = vld [vmem:[%s1 + $0x80] sm:$0xff]
    %v89 = vld [vmem:[%s1 + $0x88] sm:$0xff]
    %v90 = vld [vmem:[%s1 + $0x90] sm:$0xff]
    %v91 = vld [vmem:[%s1 + $0x98] sm:$0xff]
    %v92 = vld [vmem:[%s1 + $0xa0] sm:$0xff]
    %v93 = vld [vmem:[%s1 + $0xa8] sm:$0xff]
    %v94 = vld [vmem:[%s1 + $0xb0] sm:$0xff]
    %v95 = vld [vmem:[%s1 + $0xb8] sm:$0xff]
    %v96 = vld [vmem:[%s1 + $0xc0] sm:$0xff]
    %v97 = vld [vmem:[%s1 + $0xc8] sm:$0xff]
    %v98 = vld [vmem:[%s1 + $0xd0] sm:$0xff]
    %v99 = vld [vmem:[%s1 + $0xd8] sm:$0xff]
    %v100 = vld [vmem:[%s1 + $0xe0] sm:$0xff]
    %v101 = vld [vmem:[%s1 + $0xe8] sm:$0xff]
    %v102 = vld [vmem:[%s1 + $0xf0] sm:$0xff]
    %v103 = vld [vmem:[%s1 + $0xf8] sm:$0xff]
    %v104 = vld [vmem:[%s1 + $0x100] sm:$0xff]
    %v105 = vld [vmem:[%s1 + $0x108] sm:$0xff]
    %v106 = vld [vmem:[%s1 + $0x110] sm:$0xff]
    %v107 = vld [vmem:[%s1 + $0x118] sm:$0xff]
    %v108 = vld [vmem:[%s1 + $0x120] sm:$0xff]
    %v109 = vld [vmem:[%s1 + $0x128] sm:$0xff]
    %v110 = vld [vmem:[%s1 + $0x130] sm:$0xff]
    %v111 = vld [vmem:[%s1 + $0x138] sm:$0xff]
    %v112 = vld [vmem:[%s1 + $0x140] sm:$0xff]
    %v113 = vld [vmem:[%s1 + $0x148] sm:$0xff]
    %v114 = vld [vmem:[%s1 + $0x150] sm:$0xff]
    %v115 = vld [vmem:[%s1 + $0x158] sm:$0xff]
    %v116 = vld [vmem:[%s1 + $0x160] sm:$0xff]
    %v117 = vld [vmem:[%s1 + $0x168] sm:$0xff]
    %v118 = vld [vmem:[%s1 + $0x170] sm:$0xff]
    %v119 = vld [vmem:[%s1 + $0x178] sm:$0xff]
    %v120 = vld [vmem:[%s1 + $0x180] sm:$0xff]
    %v121 = vld [vmem:[%s1 + $0x188] sm:$0xff]
    %v122 = vld [vmem:[%s1 + $0x190] sm:$0xff]
    %v123 = vld [vmem:[%s1 + $0x198] sm:$0xff]
    %v124 = vld [vmem:[%s1 + $0x1a0] sm:$0xff]
    %v125 = vld [vmem:[%s1 + $0x1a8] sm:$0xff]
    %v126 = vld [vmem:[%s1 + $0x1b0] sm:$0xff]
    %v127 = vld [vmem:[%s1 + $0x1b8] sm:$0xff]
    %v128 = vld [vmem:[%s1 + $0x1c0] sm:$0xff]
    %v129 = vld [vmem:[%s1 + $0x1c8] sm:$0xff]
    %v130 = vld [vmem:[%s1 + $0x1d0] sm:$0xff]
    %v131 = vld [vmem:[%s1 + $0x1d8] sm:$0xff]
    %v132 = vld [vmem:[%s1 + $0x1e0] sm:$0xff]
    %v133 = vld [vmem:[%s1 + $0x1e8] sm:$0xff]
    %v134 = vld [vmem:[%s1 + $0x1f0] sm:$0xff]
    %v135 = vld [vmem:[%s1 + $0x1f8] sm:$0xff]
    %v136 = vld [vmem:[%s1 + $0x200] sm:$0xff]
    %v137 = vld [vmem:[%s1 + $0x208] sm:$0xff]
    %v138 = vld [vmem:[%s1 + $0x210] sm:$0xff]
    %v139 = vld [vmem:[%s1 + $0x218] sm:$0xff]
    %v140 = vld [vmem:[%s1 + $0x220] sm:$0xff]
    %v141 = vld [vmem:[%s1 + $0x228] sm:$0xff]
    %v142 = vld [vmem:[%s1 + $0x230] sm:$0xff]
    %v143 = vld [vmem:[%s1 + $0x238] sm:$0xff]
    %v144 = vld [vmem:[%s1 + $0x240] sm:$0xff]
    %v145 = vld [vmem:[%s1 + $0x248] sm:$0xff]
    %v146 = vld [vmem:[%s1 + $0x250] sm:$0xff]
    %v147 = vld [vmem:[%s1 + $0x258] sm:$0xff]
    %v148 = vld [vmem:[%s1 + $0x260] sm:$0xff]
    %v149 = vld [vmem:[%s1 + $0x268] sm:$0xff]
    %v150 = vld [vmem:[%s1 + $0x270] sm:$0xff]
    %v151 = vld [vmem:[%s1 + $0x278] sm:$0xff]
    %v152 = vld [vmem:[%s1 + $0x280] sm:$0xff]
    %v153 = vld [vmem:[%s1 + $0x288] sm:$0xff]
    %v154 = vld [vmem:[%s1 + $0x290] sm:$0xff]
    %v155 = vld [vmem:[%s1 + $0x298] sm:$0xff]
    %v156 = vld [vmem:[%s1 + $0x2a0] sm:$0xff]
    %v157 = vld [vmem:[%s1 + $0x2a8] sm:$0xff]
    %v158 = vld [vmem:[%s1 + $0x2b0] sm:$0xff]
    %v159 = vld [vmem:[%s1 + $0x2b8] sm:$0xff]
    %v160 = vld [vmem:[%s1 + $0x2c0] sm:$0xff]
    %v161 = vld [vmem:[%s1 + $0x2c8] sm:$0xff]
    %v162 = vld [vmem:[%s1 + $0x2d0] sm:$0xff]
    %v163 = vld [vmem:[%s1 + $0x2d8] sm:$0xff]
    %v164 = vld [vmem:[%s1 + $0x2e0] sm:$0xff]
    %v165 = vld [vmem:[%s1 + $0x2e8] sm:$0xff]
    %v166 = vld [vmem:[%s1 + $0x2f0] sm:$0xff]
    %v167 = vld [vmem:[%s1 + $0x2f8] sm:$0xff]
    %v168 = vld [vmem:[%s2] sm:$0xf]
    %v170 = vperm.slane %v168, 0
    %v171 = vperm.slane %v168, 1
    %v172 = vperm.slane %v168, 2
    %v173 = vperm.slane %v168, 3
    %vm178 = vcmask 523264
    %v180 = vsel %vm178, %v71, 0
    %182 = vmatpush.msra.mxu0 %v132
    %183 = vmatpush.msra.mxu0 %v128
    %184 = vmatpush.msra.mxu0 %v124
    %185 = vmatpush.msra.mxu0 %v120
    %186 = vmatpush.msra.mxu0 %v116
    %187 = vmatpush.msra.mxu0 %v112
    %188 = vmatpush.msra.mxu0 %v108
    %189 = vmatpush.msra.mxu0 %v104
    %190 = vmatpush.msra.mxu0 %v100
    %191 = vmatpush.msra.mxu0 %v96
    %192 = vmatpush.msra.mxu0 %v92
    %193 = vmatpush.msra.mxu0 %v88
    %194 = vmatpush.msra.mxu0 %v84
    %195 = vmatpush.msra.mxu0 %v80
    %196 = vmatpush.msra.mxu0 %v76
    %197 = vmatpush.msra.mxu0 %v72
    %198 = vmatmul.f32.gmra.mxu0 %v70
    %v199 = vpop.f32.mrf.mxu0
    %v200 = vadd.f32 %v170, %v199
    %201 = vdwg.mxu0
    %202 = vmatpush.msra.mxu0 0.0
    %203 = vmatpush.msra.mxu0 0.0
    %204 = vmatpush.msra.mxu0 0.0
    %205 = vmatpush.msra.mxu0 0.0
    %206 = vmatpush.msra.mxu0 0.0
    %207 = vmatpush.msra.mxu0 0.0
    %208 = vmatpush.msra.mxu0 0.0
    %209 = vmatpush.msra.mxu0 0.0
    %210 = vmatpush.msra.mxu0 %v164
    %211 = vmatpush.msra.mxu0 %v160
    %212 = vmatpush.msra.mxu0 %v156
    %213 = vmatpush.msra.mxu0 %v152
    %214 = vmatpush.msra.mxu0 %v148
    %215 = vmatpush.msra.mxu0 %v144
    %216 = vmatpush.msra.mxu0 %v140
    %217 = vmatpush.msra.mxu0 %v136
    %218 = vmatmul.f32.gmra.mxu0 %v180
    %v219 = vpop.f32.mrf.mxu0
    %v220 = vadd.f32 %v200, %v219
    %221 = vdwg.mxu0
    %222 = vmatpush.msra.mxu0 %v133
    %223 = vmatpush.msra.mxu0 %v129
    %224 = vmatpush.msra.mxu0 %v125
    %225 = vmatpush.msra.mxu0 %v121
    %226 = vmatpush.msra.mxu0 %v117
    %227 = vmatpush.msra.mxu0 %v113
    %228 = vmatpush.msra.mxu0 %v109
    %229 = vmatpush.msra.mxu0 %v105
    %230 = vmatpush.msra.mxu0 %v101
    %231 = vmatpush.msra.mxu0 %v97
    %232 = vmatpush.msra.mxu0 %v93
    %233 = vmatpush.msra.mxu0 %v89
    %234 = vmatpush.msra.mxu0 %v85
    %235 = vmatpush.msra.mxu0 %v81
    %236 = vmatpush.msra.mxu0 %v77
    %237 = vmatpush.msra.mxu0 %v73
    %238 = vmatmul.f32.gmra.mxu0 %v70
    %v239 = vpop.f32.mrf.mxu0
    %v240 = vadd.f32 %v171, %v239
    %241 = vdwg.mxu0
    %242 = vmatpush.msra.mxu0 0.0
    %243 = vmatpush.msra.mxu0 0.0
    %244 = vmatpush.msra.mxu0 0.0
    %245 = vmatpush.msra.mxu0 0.0
    %246 = vmatpush.msra.mxu0 0.0
    %247 = vmatpush.msra.mxu0 0.0
    %248 = vmatpush.msra.mxu0 0.0
    %249 = vmatpush.msra.mxu0 0.0
    %250 = vmatpush.msra.mxu0 %v165
    %251 = vmatpush.msra.mxu0 %v161
    %252 = vmatpush.msra.mxu0 %v157
    %253 = vmatpush.msra.mxu0 %v153
    %254 = vmatpush.msra.mxu0 %v149
    %255 = vmatpush.msra.mxu0 %v145
    %256 = vmatpush.msra.mxu0 %v141
    %257 = vmatpush.msra.mxu0 %v137
    %258 = vmatmul.f32.gmra.mxu0 %v180
    %v259 = vpop.f32.mrf.mxu0
    %v260 = vadd.f32 %v240, %v259
    %261 = vdwg.mxu0
    %262 = vmatpush.msra.mxu0 %v134
    %263 = vmatpush.msra.mxu0 %v130
    %264 = vmatpush.msra.mxu0 %v126
    %265 = vmatpush.msra.mxu0 %v122
    %266 = vmatpush.msra.mxu0 %v118
    %267 = vmatpush.msra.mxu0 %v114
    %268 = vmatpush.msra.mxu0 %v110
    %269 = vmatpush.msra.mxu0 %v106
    %270 = vmatpush.msra.mxu0 %v102
    %271 = vmatpush.msra.mxu0 %v98
    %272 = vmatpush.msra.mxu0 %v94
    %273 = vmatpush.msra.mxu0 %v90
    %274 = vmatpush.msra.mxu0 %v86
    %275 = vmatpush.msra.mxu0 %v82
    %276 = vmatpush.msra.mxu0 %v78
    %277 = vmatpush.msra.mxu0 %v74
    %278 = vmatmul.f32.gmra.mxu0 %v70
    %v279 = vpop.f32.mrf.mxu0
    %v280 = vadd.f32 %v172, %v279
    %281 = vdwg.mxu0
    %282 = vmatpush.msra.mxu0 0.0
    %283 = vmatpush.msra.mxu0 0.0
    %284 = vmatpush.msra.mxu0 0.0
    %285 = vmatpush.msra.mxu0 0.0
    %286 = vmatpush.msra.mxu0 0.0
    %287 = vmatpush.msra.mxu0 0.0
    %288 = vmatpush.msra.mxu0 0.0
    %289 = vmatpush.msra.mxu0 0.0
    %290 = vmatpush.msra.mxu0 %v166
    %291 = vmatpush.msra.mxu0 %v162
    %292 = vmatpush.msra.mxu0 %v158
    %293 = vmatpush.msra.mxu0 %v154
    %294 = vmatpush.msra.mxu0 %v150
    %295 = vmatpush.msra.mxu0 %v146
    %296 = vmatpush.msra.mxu0 %v142
    %297 = vmatpush.msra.mxu0 %v138
    %298 = vmatmul.f32.gmra.mxu0 %v180
    %v299 = vpop.f32.mrf.mxu0
    %v300 = vadd.f32 %v280, %v299
    %301 = vdwg.mxu0
    %302 = vmatpush.msra.mxu0 %v135
    %303 = vmatpush.msra.mxu0 %v131
    %304 = vmatpush.msra.mxu0 %v127
    %305 = vmatpush.msra.mxu0 %v123
    %306 = vmatpush.msra.mxu0 %v119
    %307 = vmatpush.msra.mxu0 %v115
    %308 = vmatpush.msra.mxu0 %v111
    %309 = vmatpush.msra.mxu0 %v107
    %310 = vmatpush.msra.mxu0 %v103
    %311 = vmatpush.msra.mxu0 %v99
    %312 = vmatpush.msra.mxu0 %v95
    %313 = vmatpush.msra.mxu0 %v91
    %314 = vmatpush.msra.mxu0 %v87
    %315 = vmatpush.msra.mxu0 %v83
    %316 = vmatpush.msra.mxu0 %v79
    %317 = vmatpush.msra.mxu0 %v75
    %318 = vmatmul.f32.gmra.mxu0 %v70
    %v319 = vpop.f32.mrf.mxu0
    %v320 = vadd.f32 %v173, %v319
    %321 = vdwg.mxu0
    %322 = vmatpush.msra.mxu0 0.0
    %323 = vmatpush.msra.mxu0 0.0
    %324 = vmatpush.msra.mxu0 0.0
    %325 = vmatpush.msra.mxu0 0.0
    %326 = vmatpush.msra.mxu0 0.0
    %327 = vmatpush.msra.mxu0 0.0
    %328 = vmatpush.msra.mxu0 0.0
    %329 = vmatpush.msra.mxu0 0.0
    %330 = vmatpush.msra.mxu0 %v167
    %331 = vmatpush.msra.mxu0 %v163
    %332 = vmatpush.msra.mxu0 %v159
    %333 = vmatpush.msra.mxu0 %v155
    %334 = vmatpush.msra.mxu0 %v151
    %335 = vmatpush.msra.mxu0 %v147
    %336 = vmatpush.msra.mxu0 %v143
    %337 = vmatpush.msra.mxu0 %v139
    %338 = vmatmul.f32.gmra.mxu0 %v180
    %v339 = vpop.f32.mrf.mxu0
    %v340 = vadd.f32 %v320, %v339
    %341 = vdwg.mxu0
    %v342 = vmax.f32 %v220, 0.0
    %v343 = vmax.f32 %v260, 0.0
    %v344 = vmax.f32 %v300, 0.0
    %v345 = vmax.f32 %v340, 0.0
    %v346 = vld [vmem:[#allocation3] sm:$0xff]
    %v347 = vld [vmem:[#allocation3 + $0x8] sm:$0xff]
    %v348 = vld [vmem:[#allocation3 + $0x10] sm:$0xff]
    %v349 = vld [vmem:[#allocation3 + $0x18] sm:$0xff]
    %v350 = vld [vmem:[#allocation3 + $0x20] sm:$0xff]
    %v351 = vld [vmem:[#allocation3 + $0x28] sm:$0xff]
    %v352 = vld [vmem:[#allocation3 + $0x30] sm:$0xff]
    %v353 = vld [vmem:[#allocation3 + $0x38] sm:$0xff]
    %v354 = vld [vmem:[#allocation3 + $0x40] sm:$0xff]
    %v355 = vld [vmem:[#allocation3 + $0x48] sm:$0xff]
    %v356 = vld [vmem:[#allocation3 + $0x50] sm:$0xff]
    %v357 = vld [vmem:[#allocation3 + $0x58] sm:$0xff]
    %v358 = vld [vmem:[#allocation3 + $0x60] sm:$0xff]
    %v359 = vld [vmem:[#allocation3 + $0x68] sm:$0xff]
    %v360 = vld [vmem:[#allocation3 + $0x70] sm:$0xff]
    %v361 = vld [vmem:[#allocation3 + $0x78] sm:$0xff]
    %v362 = vld [vmem:[#allocation3 + $0x80] sm:$0xff]
    %v363 = vld [vmem:[#allocation3 + $0x88] sm:$0xff]
    %v364 = vld [vmem:[#allocation3 + $0x90] sm:$0xff]
    %v365 = vld [vmem:[#allocation3 + $0x98] sm:$0xff]
    %v366 = vld [vmem:[#allocation3 + $0xa0] sm:$0xff]
    %v367 = vld [vmem:[#allocation3 + $0xa8] sm:$0xff]
    %v368 = vld [vmem:[#allocation3 + $0xb0] sm:$0xff]
    %v369 = vld [vmem:[#allocation3 + $0xb8] sm:$0xff]
    %v370 = vld [vmem:[#allocation3 + $0xc0] sm:$0xff]
    %v371 = vld [vmem:[#allocation3 + $0xc8] sm:$0xff]
    %v372 = vld [vmem:[#allocation3 + $0xd0] sm:$0xff]
    %v373 = vld [vmem:[#allocation3 + $0xd8] sm:$0xff]
    %v374 = vld [vmem:[#allocation3 + $0xe0] sm:$0xff]
    %v375 = vld [vmem:[#allocation3 + $0xe8] sm:$0xff]
    %v376 = vld [vmem:[#allocation3 + $0xf0] sm:$0xff]
    %v377 = vld [vmem:[#allocation3 + $0xf8] sm:$0xff]
    %v378 = vld [vmem:[#allocation3 + $0x100] sm:$0xff]
    %v379 = vld [vmem:[#allocation3 + $0x108] sm:$0xff]
    %v380 = vld [vmem:[#allocation3 + $0x110] sm:$0xff]
    %v381 = vld [vmem:[#allocation3 + $0x118] sm:$0xff]
    %v382 = vld [vmem:[#allocation3 + $0x120] sm:$0xff]
    %v383 = vld [vmem:[#allocation3 + $0x128] sm:$0xff]
    %v384 = vld [vmem:[#allocation3 + $0x130] sm:$0xff]
    %v385 = vld [vmem:[#allocation3 + $0x138] sm:$0xff]
    %v386 = vld [vmem:[#allocation3 + $0x140] sm:$0xff]
    %v387 = vld [vmem:[#allocation3 + $0x148] sm:$0xff]
    %v388 = vld [vmem:[#allocation3 + $0x150] sm:$0xff]
    %v389 = vld [vmem:[#allocation3 + $0x158] sm:$0xff]
    %v390 = vld [vmem:[#allocation3 + $0x160] sm:$0xff]
    %v391 = vld [vmem:[#allocation3 + $0x168] sm:$0xff]
    %v392 = vld [vmem:[#allocation3 + $0x170] sm:$0xff]
    %v393 = vld [vmem:[#allocation3 + $0x178] sm:$0xff]
    %v394 = vld [vmem:[#allocation3 + $0x180] sm:$0xff]
    %v395 = vld [vmem:[#allocation3 + $0x188] sm:$0xff]
    %v396 = vld [vmem:[#allocation3 + $0x190] sm:$0xff]
    %v397 = vld [vmem:[#allocation3 + $0x198] sm:$0xff]
    %v398 = vld [vmem:[#allocation3 + $0x1a0] sm:$0xff]
    %v399 = vld [vmem:[#allocation3 + $0x1a8] sm:$0xff]
    %v400 = vld [vmem:[#allocation3 + $0x1b0] sm:$0xff]
    %v401 = vld [vmem:[#allocation3 + $0x1b8] sm:$0xff]
    %v402 = vld [vmem:[#allocation3 + $0x1c0] sm:$0xff]
    %v403 = vld [vmem:[#allocation3 + $0x1c8] sm:$0xff]
    %v404 = vld [vmem:[#allocation3 + $0x1d0] sm:$0xff]
    %v405 = vld [vmem:[#allocation3 + $0x1d8] sm:$0xff]
    %v406 = vld [vmem:[#allocation3 + $0x1e0] sm:$0xff]
    %v407 = vld [vmem:[#allocation3 + $0x1e8] sm:$0xff]
    %v408 = vld [vmem:[#allocation3 + $0x1f0] sm:$0xff]
    %v409 = vld [vmem:[#allocation3 + $0x1f8] sm:$0xff]
    %v410 = vld [vmem:[#allocation3 + $0x200] sm:$0xff]
    %v411 = vld [vmem:[#allocation3 + $0x208] sm:$0xff]
    %v412 = vld [vmem:[#allocation3 + $0x210] sm:$0xff]
    %v413 = vld [vmem:[#allocation3 + $0x218] sm:$0xff]
    %v414 = vld [vmem:[#allocation3 + $0x220] sm:$0xff]
    %v415 = vld [vmem:[#allocation3 + $0x228] sm:$0xff]
    %v416 = vld [vmem:[#allocation3 + $0x230] sm:$0xff]
    %v417 = vld [vmem:[#allocation3 + $0x238] sm:$0xff]
    %v418 = vld [vmem:[#allocation3 + $0x240] sm:$0xff]
    %v419 = vld [vmem:[#allocation3 + $0x248] sm:$0xff]
    %v420 = vld [vmem:[#allocation3 + $0x250] sm:$0xff]
    %v421 = vld [vmem:[#allocation3 + $0x258] sm:$0xff]
    %v422 = vld [vmem:[#allocation3 + $0x260] sm:$0xff]
    %v423 = vld [vmem:[#allocation3 + $0x268] sm:$0xff]
    %v424 = vld [vmem:[#allocation3 + $0x270] sm:$0xff]
    %v425 = vld [vmem:[#allocation3 + $0x278] sm:$0xff]
    %v426 = vld [vmem:[#allocation3 + $0x280] sm:$0xff]
    %v427 = vld [vmem:[#allocation3 + $0x288] sm:$0xff]
    %v428 = vld [vmem:[#allocation3 + $0x290] sm:$0xff]
    %v429 = vld [vmem:[#allocation3 + $0x298] sm:$0xff]
    %v430 = vld [vmem:[#allocation3 + $0x2a0] sm:$0xff]
    %v431 = vld [vmem:[#allocation3 + $0x2a8] sm:$0xff]
    %v432 = vld [vmem:[#allocation3 + $0x2b0] sm:$0xff]
    %v433 = vld [vmem:[#allocation3 + $0x2b8] sm:$0xff]
    %v434 = vld [vmem:[#allocation3 + $0x2c0] sm:$0xff]
    %v435 = vld [vmem:[#allocation3 + $0x2c8] sm:$0xff]
    %v436 = vld [vmem:[#allocation3 + $0x2d0] sm:$0xff]
    %v437 = vld [vmem:[#allocation3 + $0x2d8] sm:$0xff]
    %v438 = vld [vmem:[#allocation3 + $0x2e0] sm:$0xff]
    %v439 = vld [vmem:[#allocation3 + $0x2e8] sm:$0xff]
    %v440 = vld [vmem:[#allocation3 + $0x2f0] sm:$0xff]
    %v441 = vld [vmem:[#allocation3 + $0x2f8] sm:$0xff]
    %v442 = vld [vmem:[#allocation3 + $0x300] sm:$0xff]
    %v443 = vld [vmem:[#allocation3 + $0x308] sm:$0xff]
    %v444 = vld [vmem:[#allocation3 + $0x310] sm:$0xff]
    %v445 = vld [vmem:[#allocation3 + $0x318] sm:$0xff]
    %v446 = vld [vmem:[#allocation3 + $0x320] sm:$0xff]
    %v447 = vld [vmem:[#allocation3 + $0x328] sm:$0xff]
    %v448 = vld [vmem:[#allocation3 + $0x330] sm:$0xff]
    %v449 = vld [vmem:[#allocation3 + $0x338] sm:$0xff]
    %v450 = vld [vmem:[#allocation3 + $0x340] sm:$0xff]
    %v451 = vld [vmem:[#allocation3 + $0x348] sm:$0xff]
    %v452 = vld [vmem:[#allocation3 + $0x350] sm:$0xff]
    %v453 = vld [vmem:[#allocation3 + $0x358] sm:$0xff]
    %v454 = vld [vmem:[#allocation3 + $0x360] sm:$0xff]
    %v455 = vld [vmem:[#allocation3 + $0x368] sm:$0xff]
    %v456 = vld [vmem:[#allocation3 + $0x370] sm:$0xff]
    %v457 = vld [vmem:[#allocation3 + $0x378] sm:$0xff]
    %v458 = vld [vmem:[#allocation3 + $0x380] sm:$0xff]
    %v459 = vld [vmem:[#allocation3 + $0x388] sm:$0xff]
    %v460 = vld [vmem:[#allocation3 + $0x390] sm:$0xff]
    %v461 = vld [vmem:[#allocation3 + $0x398] sm:$0xff]
    %v462 = vld [vmem:[#allocation3 + $0x3a0] sm:$0xff]
    %v463 = vld [vmem:[#allocation3 + $0x3a8] sm:$0xff]
    %v464 = vld [vmem:[#allocation3 + $0x3b0] sm:$0xff]
    %v465 = vld [vmem:[#allocation3 + $0x3b8] sm:$0xff]
    %v466 = vld [vmem:[#allocation3 + $0x3c0] sm:$0xff]
    %v467 = vld [vmem:[#allocation3 + $0x3c8] sm:$0xff]
    %v468 = vld [vmem:[#allocation3 + $0x3d0] sm:$0xff]
    %v469 = vld [vmem:[#allocation3 + $0x3d8] sm:$0xff]
    %v470 = vld [vmem:[#allocation3 + $0x3e0] sm:$0xff]
    %v471 = vld [vmem:[#allocation3 + $0x3e8] sm:$0xff]
    %v472 = vld [vmem:[#allocation3 + $0x3f0] sm:$0xff]
    %v473 = vld [vmem:[#allocation3 + $0x3f8] sm:$0xff]
    %v474 = vld [vmem:[#allocation3 + $0x400] sm:$0xff]
    %v475 = vld [vmem:[#allocation3 + $0x408] sm:$0xff]
    %v476 = vld [vmem:[#allocation3 + $0x410] sm:$0xff]
    %v477 = vld [vmem:[#allocation3 + $0x418] sm:$0xff]
    %v478 = vld [vmem:[#allocation3 + $0x420] sm:$0xff]
    %v479 = vld [vmem:[#allocation3 + $0x428] sm:$0xff]
    %v480 = vld [vmem:[#allocation3 + $0x430] sm:$0xff]
    %v481 = vld [vmem:[#allocation3 + $0x438] sm:$0xff]
    %v482 = vld [vmem:[#allocation3 + $0x440] sm:$0xff]
    %v483 = vld [vmem:[#allocation3 + $0x448] sm:$0xff]
    %v484 = vld [vmem:[#allocation3 + $0x450] sm:$0xff]
    %v485 = vld [vmem:[#allocation3 + $0x458] sm:$0xff]
    %v486 = vld [vmem:[#allocation3 + $0x460] sm:$0xff]
    %v487 = vld [vmem:[#allocation3 + $0x468] sm:$0xff]
    %v488 = vld [vmem:[#allocation3 + $0x470] sm:$0xff]
    %v489 = vld [vmem:[#allocation3 + $0x478] sm:$0xff]
    %v490 = vld [vmem:[#allocation3 + $0x480] sm:$0xff]
    %v491 = vld [vmem:[#allocation3 + $0x488] sm:$0xff]
    %v492 = vld [vmem:[#allocation3 + $0x490] sm:$0xff]
    %v493 = vld [vmem:[#allocation3 + $0x498] sm:$0xff]
    %v494 = vld [vmem:[#allocation3 + $0x4a0] sm:$0xff]
    %v495 = vld [vmem:[#allocation3 + $0x4a8] sm:$0xff]
    %v496 = vld [vmem:[#allocation3 + $0x4b0] sm:$0xff]
    %v497 = vld [vmem:[#allocation3 + $0x4b8] sm:$0xff]
    %v498 = vld [vmem:[#allocation3 + $0x4c0] sm:$0xff]
    %v499 = vld [vmem:[#allocation3 + $0x4c8] sm:$0xff]
    %v500 = vld [vmem:[#allocation3 + $0x4d0] sm:$0xff]
    %v501 = vld [vmem:[#allocation3 + $0x4d8] sm:$0xff]
    %v502 = vld [vmem:[#allocation3 + $0x4e0] sm:$0xff]
    %v503 = vld [vmem:[#allocation3 + $0x4e8] sm:$0xff]
    %v504 = vld [vmem:[#allocation3 + $0x4f0] sm:$0xff]
    %v505 = vld [vmem:[#allocation3 + $0x4f8] sm:$0xff]
    %v506 = vld [vmem:[#allocation3 + $0x500] sm:$0xff]
    %v507 = vld [vmem:[#allocation3 + $0x508] sm:$0xff]
    %v508 = vld [vmem:[#allocation3 + $0x510] sm:$0xff]
    %v509 = vld [vmem:[#allocation3 + $0x518] sm:$0xff]
    %v510 = vld [vmem:[#allocation3 + $0x520] sm:$0xff]
    %v511 = vld [vmem:[#allocation3 + $0x528] sm:$0xff]
    %v512 = vld [vmem:[#allocation3 + $0x530] sm:$0xff]
    %v513 = vld [vmem:[#allocation3 + $0x538] sm:$0xff]
    %v514 = vld [vmem:[#allocation3 + $0x540] sm:$0xff]
    %v515 = vld [vmem:[#allocation3 + $0x548] sm:$0xff]
    %v516 = vld [vmem:[#allocation3 + $0x550] sm:$0xff]
    %v517 = vld [vmem:[#allocation3 + $0x558] sm:$0xff]
    %v518 = vld [vmem:[#allocation3 + $0x560] sm:$0xff]
    %v519 = vld [vmem:[#allocation3 + $0x568] sm:$0xff]
    %v520 = vld [vmem:[#allocation3 + $0x570] sm:$0xff]
    %v521 = vld [vmem:[#allocation3 + $0x578] sm:$0xff]
    %v522 = vld [vmem:[#allocation3 + $0x580] sm:$0xff]
    %v523 = vld [vmem:[#allocation3 + $0x588] sm:$0xff]
    %v524 = vld [vmem:[#allocation3 + $0x590] sm:$0xff]
    %v525 = vld [vmem:[#allocation3 + $0x598] sm:$0xff]
    %v526 = vld [vmem:[#allocation3 + $0x5a0] sm:$0xff]
    %v527 = vld [vmem:[#allocation3 + $0x5a8] sm:$0xff]
    %v528 = vld [vmem:[#allocation3 + $0x5b0] sm:$0xff]
    %v529 = vld [vmem:[#allocation3 + $0x5b8] sm:$0xff]
    %v530 = vld [vmem:[#allocation3 + $0x5c0] sm:$0xff]
    %v531 = vld [vmem:[#allocation3 + $0x5c8] sm:$0xff]
    %v532 = vld [vmem:[#allocation3 + $0x5d0] sm:$0xff]
    %v533 = vld [vmem:[#allocation3 + $0x5d8] sm:$0xff]
    %v534 = vld [vmem:[#allocation3 + $0x5e0] sm:$0xff]
    %v535 = vld [vmem:[#allocation3 + $0x5e8] sm:$0xff]
    %v536 = vld [vmem:[#allocation3 + $0x5f0] sm:$0xff]
    %v537 = vld [vmem:[#allocation3 + $0x5f8] sm:$0xff]
    %v538 = vld [vmem:[#allocation3 + $0x600] sm:$0xff]
    %v539 = vld [vmem:[#allocation3 + $0x608] sm:$0xff]
    %v540 = vld [vmem:[#allocation3 + $0x610] sm:$0xff]
    %v541 = vld [vmem:[#allocation3 + $0x618] sm:$0xff]
    %v542 = vld [vmem:[#allocation3 + $0x620] sm:$0xff]
    %v543 = vld [vmem:[#allocation3 + $0x628] sm:$0xff]
    %v544 = vld [vmem:[#allocation3 + $0x630] sm:$0xff]
    %v545 = vld [vmem:[#allocation3 + $0x638] sm:$0xff]
    %v546 = vld [vmem:[#allocation3 + $0x640] sm:$0xff]
    %v547 = vld [vmem:[#allocation3 + $0x648] sm:$0xff]
    %v548 = vld [vmem:[#allocation3 + $0x650] sm:$0xff]
    %v549 = vld [vmem:[#allocation3 + $0x658] sm:$0xff]
    %v550 = vld [vmem:[#allocation3 + $0x660] sm:$0xff]
    %v551 = vld [vmem:[#allocation3 + $0x668] sm:$0xff]
    %v552 = vld [vmem:[#allocation3 + $0x670] sm:$0xff]
    %v553 = vld [vmem:[#allocation3 + $0x678] sm:$0xff]
    %v554 = vld [vmem:[#allocation3 + $0x680] sm:$0xff]
    %v555 = vld [vmem:[#allocation3 + $0x688] sm:$0xff]
    %v556 = vld [vmem:[#allocation3 + $0x690] sm:$0xff]
    %v557 = vld [vmem:[#allocation3 + $0x698] sm:$0xff]
    %v558 = vld [vmem:[#allocation3 + $0x6a0] sm:$0xff]
    %v559 = vld [vmem:[#allocation3 + $0x6a8] sm:$0xff]
    %v560 = vld [vmem:[#allocation3 + $0x6b0] sm:$0xff]
    %v561 = vld [vmem:[#allocation3 + $0x6b8] sm:$0xff]
    %v562 = vld [vmem:[#allocation3 + $0x6c0] sm:$0xff]
    %v563 = vld [vmem:[#allocation3 + $0x6c8] sm:$0xff]
    %v564 = vld [vmem:[#allocation3 + $0x6d0] sm:$0xff]
    %v565 = vld [vmem:[#allocation3 + $0x6d8] sm:$0xff]
    %v566 = vld [vmem:[#allocation3 + $0x6e0] sm:$0xff]
    %v567 = vld [vmem:[#allocation3 + $0x6e8] sm:$0xff]
    %v568 = vld [vmem:[#allocation3 + $0x6f0] sm:$0xff]
    %v569 = vld [vmem:[#allocation3 + $0x6f8] sm:$0xff]
    %v570 = vld [vmem:[#allocation3 + $0x700] sm:$0xff]
    %v571 = vld [vmem:[#allocation3 + $0x708] sm:$0xff]
    %v572 = vld [vmem:[#allocation3 + $0x710] sm:$0xff]
    %v573 = vld [vmem:[#allocation3 + $0x718] sm:$0xff]
    %v574 = vld [vmem:[#allocation3 + $0x720] sm:$0xff]
    %v575 = vld [vmem:[#allocation3 + $0x728] sm:$0xff]
    %v576 = vld [vmem:[#allocation3 + $0x730] sm:$0xff]
    %v577 = vld [vmem:[#allocation3 + $0x738] sm:$0xff]
    %v578 = vld [vmem:[#allocation3 + $0x740] sm:$0xff]
    %v579 = vld [vmem:[#allocation3 + $0x748] sm:$0xff]
    %v580 = vld [vmem:[#allocation3 + $0x750] sm:$0xff]
    %v581 = vld [vmem:[#allocation3 + $0x758] sm:$0xff]
    %v582 = vld [vmem:[#allocation3 + $0x760] sm:$0xff]
    %v583 = vld [vmem:[#allocation3 + $0x768] sm:$0xff]
    %v584 = vld [vmem:[#allocation3 + $0x770] sm:$0xff]
    %v585 = vld [vmem:[#allocation3 + $0x778] sm:$0xff]
    %v586 = vld [vmem:[#allocation3 + $0x780] sm:$0xff]
    %v587 = vld [vmem:[#allocation3 + $0x788] sm:$0xff]
    %v588 = vld [vmem:[#allocation3 + $0x790] sm:$0xff]
    %v589 = vld [vmem:[#allocation3 + $0x798] sm:$0xff]
    %v590 = vld [vmem:[#allocation3 + $0x7a0] sm:$0xff]
    %v591 = vld [vmem:[#allocation3 + $0x7a8] sm:$0xff]
    %v592 = vld [vmem:[#allocation3 + $0x7b0] sm:$0xff]
    %v593 = vld [vmem:[#allocation3 + $0x7b8] sm:$0xff]
    %v594 = vld [vmem:[#allocation3 + $0x7c0] sm:$0xff]
    %v595 = vld [vmem:[#allocation3 + $0x7c8] sm:$0xff]
    %v596 = vld [vmem:[#allocation3 + $0x7d0] sm:$0xff]
    %v597 = vld [vmem:[#allocation3 + $0x7d8] sm:$0xff]
    %v598 = vld [vmem:[#allocation3 + $0x7e0] sm:$0xff]
    %v599 = vld [vmem:[#allocation3 + $0x7e8] sm:$0xff]
    %v600 = vld [vmem:[#allocation3 + $0x7f0] sm:$0xff]
    %v601 = vld [vmem:[#allocation3 + $0x7f8] sm:$0xff]
    %v602 = vld [vmem:[%s4] sm:$0xf]
    %v604 = vperm.slane %v602, 0
    %v605 = vperm.slane %v602, 1
    %v606 = vperm.slane %v602, 2
    %v607 = vperm.slane %v602, 3
    %612 = vmatpush.msra.mxu0 %v406
    %613 = vmatpush.msra.mxu0 %v402
    %614 = vmatpush.msra.mxu0 %v398
    %615 = vmatpush.msra.mxu0 %v394
    %616 = vmatpush.msra.mxu0 %v390
    %617 = vmatpush.msra.mxu0 %v386
    %618 = vmatpush.msra.mxu0 %v382
    %619 = vmatpush.msra.mxu0 %v378
    %620 = vmatpush.msra.mxu0 %v374
    %621 = vmatpush.msra.mxu0 %v370
    %622 = vmatpush.msra.mxu0 %v366
    %623 = vmatpush.msra.mxu0 %v362
    %624 = vmatpush.msra.mxu0 %v358
    %625 = vmatpush.msra.mxu0 %v354
    %626 = vmatpush.msra.mxu0 %v350
    %627 = vmatpush.msra.mxu0 %v346
    %628 = vmatmul.f32.gmra.mxu0 %v342
    %v629 = vpop.f32.mrf.mxu0
    %v630 = vadd.f32 %v604, %v629
    %631 = vdwg.mxu0
    %632 = vmatpush.msra.mxu0 %v470
    %633 = vmatpush.msra.mxu0 %v466
    %634 = vmatpush.msra.mxu0 %v462
    %635 = vmatpush.msra.mxu0 %v458
    %636 = vmatpush.msra.mxu0 %v454
    %637 = vmatpush.msra.mxu0 %v450
    %638 = vmatpush.msra.mxu0 %v446
    %639 = vmatpush.msra.mxu0 %v442
    %640 = vmatpush.msra.mxu0 %v438
    %641 = vmatpush.msra.mxu0 %v434
    %642 = vmatpush.msra.mxu0 %v430
    %643 = vmatpush.msra.mxu0 %v426
    %644 = vmatpush.msra.mxu0 %v422
    %645 = vmatpush.msra.mxu0 %v418
    %646 = vmatpush.msra.mxu0 %v414
    %647 = vmatpush.msra.mxu0 %v410
    %648 = vmatmul.f32.gmra.mxu0 %v343
    %v649 = vpop.f32.mrf.mxu0
    %v650 = vadd.f32 %v630, %v649
    %651 = vdwg.mxu0
    %652 = vmatpush.msra.mxu0 %v534
    %653 = vmatpush.msra.mxu0 %v530
    %654 = vmatpush.msra.mxu0 %v526
    %655 = vmatpush.msra.mxu0 %v522
    %656 = vmatpush.msra.mxu0 %v518
    %657 = vmatpush.msra.mxu0 %v514
    %658 = vmatpush.msra.mxu0 %v510
    %659 = vmatpush.msra.mxu0 %v506
    %660 = vmatpush.msra.mxu0 %v502
    %661 = vmatpush.msra.mxu0 %v498
    %662 = vmatpush.msra.mxu0 %v494
    %663 = vmatpush.msra.mxu0 %v490
    %664 = vmatpush.msra.mxu0 %v486
    %665 = vmatpush.msra.mxu0 %v482
    %666 = vmatpush.msra.mxu0 %v478
    %667 = vmatpush.msra.mxu0 %v474
    %668 = vmatmul.f32.gmra.mxu0 %v344
    %v669 = vpop.f32.mrf.mxu0
    %v670 = vadd.f32 %v650, %v669
    %671 = vdwg.mxu0
    %672 = vmatpush.msra.mxu0 %v598
    %673 = vmatpush.msra.mxu0 %v594
    %674 = vmatpush.msra.mxu0 %v590
    %675 = vmatpush.msra.mxu0 %v586
    %676 = vmatpush.msra.mxu0 %v582
    %677 = vmatpush.msra.mxu0 %v578
    %678 = vmatpush.msra.mxu0 %v574
    %679 = vmatpush.msra.mxu0 %v570
    %680 = vmatpush.msra.mxu0 %v566
    %681 = vmatpush.msra.mxu0 %v562
    %682 = vmatpush.msra.mxu0 %v558
    %683 = vmatpush.msra.mxu0 %v554
    %684 = vmatpush.msra.mxu0 %v550
    %685 = vmatpush.msra.mxu0 %v546
    %686 = vmatpush.msra.mxu0 %v542
    %687 = vmatpush.msra.mxu0 %v538
    %688 = vmatmul.f32.gmra.mxu0 %v345
    %v689 = vpop.f32.mrf.mxu0
    %v690 = vadd.f32 %v670, %v689
    %691 = vdwg.mxu0
    %692 = vmatpush.msra.mxu0 %v407
    %693 = vmatpush.msra.mxu0 %v403
    %694 = vmatpush.msra.mxu0 %v399
    %695 = vmatpush.msra.mxu0 %v395
    %696 = vmatpush.msra.mxu0 %v391
    %697 = vmatpush.msra.mxu0 %v387
    %698 = vmatpush.msra.mxu0 %v383
    %699 = vmatpush.msra.mxu0 %v379
    %700 = vmatpush.msra.mxu0 %v375
    %701 = vmatpush.msra.mxu0 %v371
    %702 = vmatpush.msra.mxu0 %v367
    %703 = vmatpush.msra.mxu0 %v363
    %704 = vmatpush.msra.mxu0 %v359
    %705 = vmatpush.msra.mxu0 %v355
    %706 = vmatpush.msra.mxu0 %v351
    %707 = vmatpush.msra.mxu0 %v347
    %708 = vmatmul.f32.gmra.mxu0 %v342
    %v709 = vpop.f32.mrf.mxu0
    %v710 = vadd.f32 %v605, %v709
    %711 = vdwg.mxu0
    %712 = vmatpush.msra.mxu0 %v471
    %713 = vmatpush.msra.mxu0 %v467
    %714 = vmatpush.msra.mxu0 %v463
    %715 = vmatpush.msra.mxu0 %v459
    %716 = vmatpush.msra.mxu0 %v455
    %717 = vmatpush.msra.mxu0 %v451
    %718 = vmatpush.msra.mxu0 %v447
    %719 = vmatpush.msra.mxu0 %v443
    %720 = vmatpush.msra.mxu0 %v439
    %721 = vmatpush.msra.mxu0 %v435
    %722 = vmatpush.msra.mxu0 %v431
    %723 = vmatpush.msra.mxu0 %v427
    %724 = vmatpush.msra.mxu0 %v423
    %725 = vmatpush.msra.mxu0 %v419
    %726 = vmatpush.msra.mxu0 %v415
    %727 = vmatpush.msra.mxu0 %v411
    %728 = vmatmul.f32.gmra.mxu0 %v343
    %v729 = vpop.f32.mrf.mxu0
    %v730 = vadd.f32 %v710, %v729
    %731 = vdwg.mxu0
    %732 = vmatpush.msra.mxu0 %v535
    %733 = vmatpush.msra.mxu0 %v531
    %734 = vmatpush.msra.mxu0 %v527
    %735 = vmatpush.msra.mxu0 %v523
    %736 = vmatpush.msra.mxu0 %v519
    %737 = vmatpush.msra.mxu0 %v515
    %738 = vmatpush.msra.mxu0 %v511
    %739 = vmatpush.msra.mxu0 %v507
    %740 = vmatpush.msra.mxu0 %v503
    %741 = vmatpush.msra.mxu0 %v499
    %742 = vmatpush.msra.mxu0 %v495
    %743 = vmatpush.msra.mxu0 %v491
    %744 = vmatpush.msra.mxu0 %v487
    %745 = vmatpush.msra.mxu0 %v483
    %746 = vmatpush.msra.mxu0 %v479
    %747 = vmatpush.msra.mxu0 %v475
    %748 = vmatmul.f32.gmra.mxu0 %v344
    %v749 = vpop.f32.mrf.mxu0
    %v750 = vadd.f32 %v730, %v749
    %751 = vdwg.mxu0
    %752 = vmatpush.msra.mxu0 %v599
    %753 = vmatpush.msra.mxu0 %v595
    %754 = vmatpush.msra.mxu0 %v591
    %755 = vmatpush.msra.mxu0 %v587
    %756 = vmatpush.msra.mxu0 %v583
    %757 = vmatpush.msra.mxu0 %v579
    %758 = vmatpush.msra.mxu0 %v575
    %759 = vmatpush.msra.mxu0 %v571
    %760 = vmatpush.msra.mxu0 %v567
    %761 = vmatpush.msra.mxu0 %v563
    %762 = vmatpush.msra.mxu0 %v559
    %763 = vmatpush.msra.mxu0 %v555
    %764 = vmatpush.msra.mxu0 %v551
    %765 = vmatpush.msra.mxu0 %v547
    %766 = vmatpush.msra.mxu0 %v543
    %767 = vmatpush.msra.mxu0 %v539
    %768 = vmatmul.f32.gmra.mxu0 %v345
    %v769 = vpop.f32.mrf.mxu0
    %v770 = vadd.f32 %v750, %v769
    %771 = vdwg.mxu0
    %772 = vmatpush.msra.mxu0 %v408
    %773 = vmatpush.msra.mxu0 %v404
    %774 = vmatpush.msra.mxu0 %v400
    %775 = vmatpush.msra.mxu0 %v396
    %776 = vmatpush.msra.mxu0 %v392
    %777 = vmatpush.msra.mxu0 %v388
    %778 = vmatpush.msra.mxu0 %v384
    %779 = vmatpush.msra.mxu0 %v380
    %780 = vmatpush.msra.mxu0 %v376
    %781 = vmatpush.msra.mxu0 %v372
    %782 = vmatpush.msra.mxu0 %v368
    %783 = vmatpush.msra.mxu0 %v364
    %784 = vmatpush.msra.mxu0 %v360
    %785 = vmatpush.msra.mxu0 %v356
    %786 = vmatpush.msra.mxu0 %v352
    %787 = vmatpush.msra.mxu0 %v348
    %788 = vmatmul.f32.gmra.mxu0 %v342
    %v789 = vpop.f32.mrf.mxu0
    %v790 = vadd.f32 %v606, %v789
    %791 = vdwg.mxu0
    %792 = vmatpush.msra.mxu0 %v472
    %793 = vmatpush.msra.mxu0 %v468
    %794 = vmatpush.msra.mxu0 %v464
    %795 = vmatpush.msra.mxu0 %v460
    %796 = vmatpush.msra.mxu0 %v456
    %797 = vmatpush.msra.mxu0 %v452
    %798 = vmatpush.msra.mxu0 %v448
    %799 = vmatpush.msra.mxu0 %v444
    %800 = vmatpush.msra.mxu0 %v440
    %801 = vmatpush.msra.mxu0 %v436
    %802 = vmatpush.msra.mxu0 %v432
    %803 = vmatpush.msra.mxu0 %v428
    %804 = vmatpush.msra.mxu0 %v424
    %805 = vmatpush.msra.mxu0 %v420
    %806 = vmatpush.msra.mxu0 %v416
    %807 = vmatpush.msra.mxu0 %v412
    %808 = vmatmul.f32.gmra.mxu0 %v343
    %v809 = vpop.f32.mrf.mxu0
    %v810 = vadd.f32 %v790, %v809
    %811 = vdwg.mxu0
    %812 = vmatpush.msra.mxu0 %v536
    %813 = vmatpush.msra.mxu0 %v532
    %814 = vmatpush.msra.mxu0 %v528
    %815 = vmatpush.msra.mxu0 %v524
    %816 = vmatpush.msra.mxu0 %v520
    %817 = vmatpush.msra.mxu0 %v516
    %818 = vmatpush.msra.mxu0 %v512
    %819 = vmatpush.msra.mxu0 %v508
    %820 = vmatpush.msra.mxu0 %v504
    %821 = vmatpush.msra.mxu0 %v500
    %822 = vmatpush.msra.mxu0 %v496
    %823 = vmatpush.msra.mxu0 %v492
    %824 = vmatpush.msra.mxu0 %v488
    %825 = vmatpush.msra.mxu0 %v484
    %826 = vmatpush.msra.mxu0 %v480
    %827 = vmatpush.msra.mxu0 %v476
    %828 = vmatmul.f32.gmra.mxu0 %v344
    %v829 = vpop.f32.mrf.mxu0
    %v830 = vadd.f32 %v810, %v829
    %831 = vdwg.mxu0
    %832 = vmatpush.msra.mxu0 %v600
    %833 = vmatpush.msra.mxu0 %v596
    %834 = vmatpush.msra.mxu0 %v592
    %835 = vmatpush.msra.mxu0 %v588
    %836 = vmatpush.msra.mxu0 %v584
    %837 = vmatpush.msra.mxu0 %v580
    %838 = vmatpush.msra.mxu0 %v576
    %839 = vmatpush.msra.mxu0 %v572
    %840 = vmatpush.msra.mxu0 %v568
    %841 = vmatpush.msra.mxu0 %v564
    %842 = vmatpush.msra.mxu0 %v560
    %843 = vmatpush.msra.mxu0 %v556
    %844 = vmatpush.msra.mxu0 %v552
    %845 = vmatpush.msra.mxu0 %v548
    %846 = vmatpush.msra.mxu0 %v544
    %847 = vmatpush.msra.mxu0 %v540
    %848 = vmatmul.f32.gmra.mxu0 %v345
    %v849 = vpop.f32.mrf.mxu0
    %v850 = vadd.f32 %v830, %v849
    %851 = vdwg.mxu0
    %852 = vmatpush.msra.mxu0 %v409
    %853 = vmatpush.msra.mxu0 %v405
    %854 = vmatpush.msra.mxu0 %v401
    %855 = vmatpush.msra.mxu0 %v397
    %856 = vmatpush.msra.mxu0 %v393
    %857 = vmatpush.msra.mxu0 %v389
    %858 = vmatpush.msra.mxu0 %v385
    %859 = vmatpush.msra.mxu0 %v381
    %860 = vmatpush.msra.mxu0 %v377
    %861 = vmatpush.msra.mxu0 %v373
    %862 = vmatpush.msra.mxu0 %v369
    %863 = vmatpush.msra.mxu0 %v365
    %864 = vmatpush.msra.mxu0 %v361
    %865 = vmatpush.msra.mxu0 %v357
    %866 = vmatpush.msra.mxu0 %v353
    %867 = vmatpush.msra.mxu0 %v349
    %868 = vmatmul.f32.gmra.mxu0 %v342
    %v869 = vpop.f32.mrf.mxu0
    %v870 = vadd.f32 %v607, %v869
    %871 = vdwg.mxu0
    %872 = vmatpush.msra.mxu0 %v473
    %873 = vmatpush.msra.mxu0 %v469
    %874 = vmatpush.msra.mxu0 %v465
    %875 = vmatpush.msra.mxu0 %v461
    %876 = vmatpush.msra.mxu0 %v457
    %877 = vmatpush.msra.mxu0 %v453
    %878 = vmatpush.msra.mxu0 %v449
    %879 = vmatpush.msra.mxu0 %v445
    %880 = vmatpush.msra.mxu0 %v441
    %881 = vmatpush.msra.mxu0 %v437
    %882 = vmatpush.msra.mxu0 %v433
    %883 = vmatpush.msra.mxu0 %v429
    %884 = vmatpush.msra.mxu0 %v425
    %885 = vmatpush.msra.mxu0 %v421
    %886 = vmatpush.msra.mxu0 %v417
    %887 = vmatpush.msra.mxu0 %v413
    %888 = vmatmul.f32.gmra.mxu0 %v343
    %v889 = vpop.f32.mrf.mxu0
    %v890 = vadd.f32 %v870, %v889
    %891 = vdwg.mxu0
    %892 = vmatpush.msra.mxu0 %v537
    %893 = vmatpush.msra.mxu0 %v533
    %894 = vmatpush.msra.mxu0 %v529
    %895 = vmatpush.msra.mxu0 %v525
    %896 = vmatpush.msra.mxu0 %v521
    %897 = vmatpush.msra.mxu0 %v517
    %898 = vmatpush.msra.mxu0 %v513
    %899 = vmatpush.msra.mxu0 %v509
    %900 = vmatpush.msra.mxu0 %v505
    %901 = vmatpush.msra.mxu0 %v501
    %902 = vmatpush.msra.mxu0 %v497
    %903 = vmatpush.msra.mxu0 %v493
    %904 = vmatpush.msra.mxu0 %v489
    %905 = vmatpush.msra.mxu0 %v485
    %906 = vmatpush.msra.mxu0 %v481
    %907 = vmatpush.msra.mxu0 %v477
    %908 = vmatmul.f32.gmra.mxu0 %v344
    %v909 = vpop.f32.mrf.mxu0
    %v910 = vadd.f32 %v890, %v909
    %911 = vdwg.mxu0
    %912 = vmatpush.msra.mxu0 %v601
    %913 = vmatpush.msra.mxu0 %v597
    %914 = vmatpush.msra.mxu0 %v593
    %915 = vmatpush.msra.mxu0 %v589
    %916 = vmatpush.msra.mxu0 %v585
    %917 = vmatpush.msra.mxu0 %v581
    %918 = vmatpush.msra.mxu0 %v577
    %919 = vmatpush.msra.mxu0 %v573
    %920 = vmatpush.msra.mxu0 %v569
    %921 = vmatpush.msra.mxu0 %v565
    %922 = vmatpush.msra.mxu0 %v561
    %923 = vmatpush.msra.mxu0 %v557
    %924 = vmatpush.msra.mxu0 %v553
    %925 = vmatpush.msra.mxu0 %v549
    %926 = vmatpush.msra.mxu0 %v545
    %927 = vmatpush.msra.mxu0 %v541
    %928 = vmatmul.f32.gmra.mxu0 %v345
    %v929 = vpop.f32.mrf.mxu0
    %v930 = vadd.f32 %v910, %v929
    %931 = vdwg.mxu0
    %v932 = vmax.f32 %v690, 0.0
    %v933 = vmax.f32 %v770, 0.0
    %v934 = vmax.f32 %v850, 0.0
    %v935 = vmax.f32 %v930, 0.0
    %940 = vrot.lane.b32.xlu0 %v932, 127
    %v941 = vpop.permute.xlu0 %940
    %942 = vrot.lane.b32.xlu0 %v933, 127
    %v943 = vpop.permute.xlu0 %942
    %944 = vrot.lane.b32.xlu0 %v934, 127
    %v945 = vpop.permute.xlu0 %944
    %946 = vrot.lane.b32.xlu0 %v935, 127
    %v947 = vpop.permute.xlu0 %946
    %vm948 = vcmask 1039360
    %v949 = vsel %vm948, %v941, %v943
    %v950 = vsel %vm948, %v943, %v945
    %v951 = vsel %vm948, %v945, %v947
    %v956 = vmax.f32 %v932, %v949
    %v957 = vmax.f32 %v933, %v950
    %v958 = vmax.f32 %v934, %v951
    %v959 = vmax.f32 %v935, %v947
    %960 = vrot.lane.b32.xlu0 %v932, 120
    %v961 = vpop.permute.xlu0 %960
    %962 = vrot.lane.b32.xlu0 %v933, 120
    %v963 = vpop.permute.xlu0 %962
    %964 = vrot.lane.b32.xlu0 %v934, 120
    %v965 = vpop.permute.xlu0 %964
    %966 = vrot.lane.b32.xlu0 %v935, 120
    %v967 = vpop.permute.xlu0 %966
    %vm968 = vcmask 982016
    %v969 = vsel %vm968, %v961, %v963
    %v970 = vsel %vm968, %v963, %v965
    %v971 = vsel %vm968, %v965, %v967
    %v976 = vmax.f32 %v956, %v969
    %v977 = vmax.f32 %v957, %v970
    %v978 = vmax.f32 %v958, %v971
    %v979 = vmax.f32 %v959, %v967
    %980 = vrot.lane.b32.xlu0 %v932, 119
    %v981 = vpop.permute.xlu0 %980
    %982 = vrot.lane.b32.xlu0 %v933, 119
    %v983 = vpop.permute.xlu0 %982
    %984 = vrot.lane.b32.xlu0 %v934, 119
    %v985 = vpop.permute.xlu0 %984
    %986 = vrot.lane.b32.xlu0 %v935, 119
    %v987 = vpop.permute.xlu0 %986
    %vm988 = vcmask 973824
    %v989 = vsel %vm988, %v981, %v983
    %v990 = vsel %vm988, %v983, %v985
    %v991 = vsel %vm988, %v985, %v987
    %v996 = vmax.f32 %v976, %v989
    %v997 = vmax.f32 %v977, %v990
    %v998 = vmax.f32 %v978, %v991
    %v999 = vmax.f32 %v979, %v987
    %v1000 = vld [vmem:[%s5] sm:$0xff]
    %v1001 = vld [vmem:[%s5 + $0x8] sm:$0xff]
    %v1002 = vld [vmem:[%s5 + $0x10] sm:$0xff]
    %v1003 = vld [vmem:[%s5 + $0x18] sm:$0xff]
    %v1004 = vld [vmem:[%s5 + $0x20] sm:$0xff]
    %v1005 = vld [vmem:[%s5 + $0x28] sm:$0xff]
    %v1006 = vld [vmem:[%s5 + $0x30] sm:$0xff]
    %v1007 = vld [vmem:[%s5 + $0x38] sm:$0xff]
    %v1008 = vld [vmem:[%s5 + $0x40] sm:$0xff]
    %v1009 = vld [vmem:[%s5 + $0x48] sm:$0xff]
    %v1010 = vld [vmem:[%s5 + $0x50] sm:$0xff]
    %v1011 = vld [vmem:[%s5 + $0x58] sm:$0xff]
    %v1012 = vld [vmem:[%s5 + $0x60] sm:$0xff]
    %v1013 = vld [vmem:[%s5 + $0x68] sm:$0xff]
    %v1014 = vld [vmem:[%s5 + $0x70] sm:$0xff]
    %v1015 = vld [vmem:[%s5 + $0x78] sm:$0xff]
    %v1016 = vld [vmem:[%s5 + $0x80] sm:$0xff]
    %v1017 = vld [vmem:[%s5 + $0x88] sm:$0xff]
    %v1018 = vld [vmem:[%s5 + $0x90] sm:$0xff]
    %v1019 = vld [vmem:[%s5 + $0x98] sm:$0xff]
    %v1020 = vld [vmem:[%s5 + $0xa0] sm:$0xff]
    %v1021 = vld [vmem:[%s5 + $0xa8] sm:$0xff]
    %v1022 = vld [vmem:[%s5 + $0xb0] sm:$0xff]
    %v1023 = vld [vmem:[%s5 + $0xb8] sm:$0xff]
    %v1024 = vld [vmem:[%s5 + $0xc0] sm:$0xff]
    %v1025 = vld [vmem:[%s5 + $0xc8] sm:$0xff]
    %v1026 = vld [vmem:[%s5 + $0xd0] sm:$0xff]
    %v1027 = vld [vmem:[%s5 + $0xd8] sm:$0xff]
    %v1028 = vld [vmem:[%s5 + $0xe0] sm:$0xff]
    %v1029 = vld [vmem:[%s5 + $0xe8] sm:$0xff]
    %v1030 = vld [vmem:[%s5 + $0xf0] sm:$0xff]
    %v1031 = vld [vmem:[%s5 + $0xf8] sm:$0xff]
    %v1032 = vld [vmem:[%s5 + $0x100] sm:$0xff]
    %v1033 = vld [vmem:[%s5 + $0x108] sm:$0xff]
    %v1034 = vld [vmem:[%s5 + $0x110] sm:$0xff]
    %v1035 = vld [vmem:[%s5 + $0x118] sm:$0xff]
    %v1036 = vld [vmem:[%s5 + $0x120] sm:$0xff]
    %v1037 = vld [vmem:[%s5 + $0x128] sm:$0xff]
    %v1038 = vld [vmem:[%s5 + $0x130] sm:$0xff]
    %v1039 = vld [vmem:[%s5 + $0x138] sm:$0xff]
    %v1040 = vld [vmem:[%s5 + $0x140] sm:$0xff]
    %v1041 = vld [vmem:[%s5 + $0x148] sm:$0xff]
    %v1042 = vld [vmem:[%s5 + $0x150] sm:$0xff]
    %v1043 = vld [vmem:[%s5 + $0x158] sm:$0xff]
    %v1044 = vld [vmem:[%s5 + $0x160] sm:$0xff]
    %v1045 = vld [vmem:[%s5 + $0x168] sm:$0xff]
    %v1046 = vld [vmem:[%s5 + $0x170] sm:$0xff]
    %v1047 = vld [vmem:[%s5 + $0x178] sm:$0xff]
    %v1048 = vld [vmem:[%s5 + $0x180] sm:$0xff]
    %v1049 = vld [vmem:[%s5 + $0x188] sm:$0xff]
    %v1050 = vld [vmem:[%s5 + $0x190] sm:$0xff]
    %v1051 = vld [vmem:[%s5 + $0x198] sm:$0xff]
    %v1052 = vld [vmem:[%s5 + $0x1a0] sm:$0xff]
    %v1053 = vld [vmem:[%s5 + $0x1a8] sm:$0xff]
    %v1054 = vld [vmem:[%s5 + $0x1b0] sm:$0xff]
    %v1055 = vld [vmem:[%s5 + $0x1b8] sm:$0xff]
    %v1056 = vld [vmem:[%s5 + $0x1c0] sm:$0xff]
    %v1057 = vld [vmem:[%s5 + $0x1c8] sm:$0xff]
    %v1058 = vld [vmem:[%s5 + $0x1d0] sm:$0xff]
    %v1059 = vld [vmem:[%s5 + $0x1d8] sm:$0xff]
    %v1060 = vld [vmem:[%s5 + $0x1e0] sm:$0xff]
    %v1061 = vld [vmem:[%s5 + $0x1e8] sm:$0xff]
    %v1062 = vld [vmem:[%s5 + $0x1f0] sm:$0x7f]
    %v1063 = vld [vmem:[%s6] sm:$0x1]
    %v1065 = vperm.slane %v1063, 0
    %v1068 = vsel %vm988, %v999, 0
    %vm1070 = vcmask 1046528
    %v1072 = vsel %vm1070, %v1062, 0
    %1074 = vmatpush.msra.mxu0 %v1015
    %1075 = vmatpush.msra.mxu0 %v1014
    %1076 = vmatpush.msra.mxu0 %v1013
    %1077 = vmatpush.msra.mxu0 %v1012
    %1078 = vmatpush.msra.mxu0 %v1011
    %1079 = vmatpush.msra.mxu0 %v1010
    %1080 = vmatpush.msra.mxu0 %v1009
    %1081 = vmatpush.msra.mxu0 %v1008
    %1082 = vmatpush.msra.mxu0 %v1007
    %1083 = vmatpush.msra.mxu0 %v1006
    %1084 = vmatpush.msra.mxu0 %v1005
    %1085 = vmatpush.msra.mxu0 %v1004
    %1086 = vmatpush.msra.mxu0 %v1003
    %1087 = vmatpush.msra.mxu0 %v1002
    %1088 = vmatpush.msra.mxu0 %v1001
    %1089 = vmatpush.msra.mxu0 %v1000
    %1090 = vmatmul.f32.gmra.mxu0 %v996
    %v1091 = vpop.f32.mrf.mxu0
    %v1092 = vadd.f32 %v1065, %v1091
    %1093 = vdwg.mxu0
    %1094 = vmatpush.msra.mxu0 %v1031
    %1095 = vmatpush.msra.mxu0 %v1030
    %1096 = vmatpush.msra.mxu0 %v1029
    %1097 = vmatpush.msra.mxu0 %v1028
    %1098 = vmatpush.msra.mxu0 %v1027
    %1099 = vmatpush.msra.mxu0 %v1026
    %1100 = vmatpush.msra.mxu0 %v1025
    %1101 = vmatpush.msra.mxu0 %v1024
    %1102 = vmatpush.msra.mxu0 %v1023
    %1103 = vmatpush.msra.mxu0 %v1022
    %1104 = vmatpush.msra.mxu0 %v1021
    %1105 = vmatpush.msra.mxu0 %v1020
    %1106 = vmatpush.msra.mxu0 %v1019
    %1107 = vmatpush.msra.mxu0 %v1018
    %1108 = vmatpush.msra.mxu0 %v1017
    %1109 = vmatpush.msra.mxu0 %v1016
    %1110 = vmatmul.f32.gmra.mxu0 %v997
    %v1111 = vpop.f32.mrf.mxu0
    %v1112 = vadd.f32 %v1092, %v1111
    %1113 = vdwg.mxu0
    %1114 = vmatpush.msra.mxu0 %v1047
    %1115 = vmatpush.msra.mxu0 %v1046
    %1116 = vmatpush.msra.mxu0 %v1045
    %1117 = vmatpush.msra.mxu0 %v1044
    %1118 = vmatpush.msra.mxu0 %v1043
    %1119 = vmatpush.msra.mxu0 %v1042
    %1120 = vmatpush.msra.mxu0 %v1041
    %1121 = vmatpush.msra.mxu0 %v1040
    %1122 = vmatpush.msra.mxu0 %v1039
    %1123 = vmatpush.msra.mxu0 %v1038
    %1124 = vmatpush.msra.mxu0 %v1037
    %1125 = vmatpush.msra.mxu0 %v1036
    %1126 = vmatpush.msra.mxu0 %v1035
    %1127 = vmatpush.msra.mxu0 %v1034
    %1128 = vmatpush.msra.mxu0 %v1033
    %1129 = vmatpush.msra.mxu0 %v1032
    %1130 = vmatmul.f32.gmra.mxu0 %v998
    %v1131 = vpop.f32.mrf.mxu0
    %v1132 = vadd.f32 %v1112, %v1131
    %1133 = vdwg.mxu0
    %1134 = vmatpush.msra.mxu0 0.0
    %1135 = vmatpush.msra.mxu0 %v1072
    %1136 = vmatpush.msra.mxu0 %v1061
    %1137 = vmatpush.msra.mxu0 %v1060
    %1138 = vmatpush.msra.mxu0 %v1059
    %1139 = vmatpush.msra.mxu0 %v1058
    %1140 = vmatpush.msra.mxu0 %v1057
    %1141 = vmatpush.msra.mxu0 %v1056
    %1142 = vmatpush.msra.mxu0 %v1055
    %1143 = vmatpush.msra.mxu0 %v1054
    %1144 = vmatpush.msra.mxu0 %v1053
    %1145 = vmatpush.msra.mxu0 %v1052
    %1146 = vmatpush.msra.mxu0 %v1051
    %1147 = vmatpush.msra.mxu0 %v1050
    %1148 = vmatpush.msra.mxu0 %v1049
    %1149 = vmatpush.msra.mxu0 %v1048
    %1150 = vmatmul.f32.gmra.mxu0 %v1068
    %v1151 = vpop.f32.mrf.mxu0
    %v1152 = vadd.f32 %v1132, %v1151
    %1153 = vdwg.mxu0
    %v1154 = vmax.f32 %v1152, 0.0
    %v1155 = vlaneseq
    %v1156 = vshrl.u32 %v1155, 7
    %vm1157 = vcmp.lt.s32.totalorder %v1156, 0
    %v1158 = vsub.s32 0, %v1156
    %v1159 = vsel %vm1157, %v1158, %v1156
    %v1160 = vshrl.u32 %v1159, 2
    %v1161 = vand.u32 %v1159, 3
    %v1162 = vsub.s32 0, %v1161
    %v1163 = vsel %vm1157, %v1162, %v1161
    %vm1164 = vcmp.ne.s32.totalorder %v1163, 0
    %vm1165 = vcmp.lt.s32.totalorder %v1163, 0
    %vm1166 = vmand %vm1165, %vm1164
    %v1167 = vadd.s32 %v1163, 4
    %v1168 = vsel %vm1166, %v1167, %v1163
    %vm1169 = vcmask 517120
    %1170 = vst.msk [vmem:[#allocation2] sm:$0x3] %vm1169, 0.0
    %1171 = vst.msk [vmem:[#allocation2 + $0x2] sm:$0xff] %vm178, %v1154
    %v1172 = vld [vmem:[#allocation2] sm:$0xff]
    %vm1173 = vcmp.ge.s32.totalorder %v1168, 2
    %v1174 = vsel %vm1173, 1, 0
    %vm1175 = vcmp.eq.s32.totalorder %v1174, 1
    %v1176 = vsel %vm1175, %v1172, 0.0
    %v1177 = vld [vmem:[%s7] sm:$0xff]
    %v1178 = vld [vmem:[%s7 + $0x8] sm:$0xff]
    %v1179 = vld [vmem:[%s7 + $0x10] sm:$0xff]
    %v1180 = vld [vmem:[%s7 + $0x18] sm:$0xff]
    %v1181 = vld [vmem:[%s7 + $0x20] sm:$0xff]
    %v1182 = vld [vmem:[%s7 + $0x28] sm:$0xff]
    %v1183 = vld [vmem:[%s7 + $0x30] sm:$0xff]
    %v1184 = vld [vmem:[%s7 + $0x38] sm:$0xff]
    %v1185 = vld [vmem:[#allocation2 + $0x1] sm:$0xff]
    %vm1186 = vcmp.ge.s32.totalorder %v1168, 1
    %v1187 = vsel %vm1186, 1, 0
    %vm1188 = vcmp.eq.s32.totalorder %v1187, 1
    %v1189 = vsel %vm1188, %v1185, 0.0
    %s1190 = scalar_lea.vmem %s7, 64
    %v1191 = vld [vmem:[%s1190] sm:$0xff]
    %v1192 = vld [vmem:[%s1190 + $0x8] sm:$0xff]
    %v1193 = vld [vmem:[%s1190 + $0x10] sm:$0xff]
    %v1194 = vld [vmem:[%s1190 + $0x18] sm:$0xff]
    %v1195 = vld [vmem:[%s1190 + $0x20] sm:$0xff]
    %v1196 = vld [vmem:[%s1190 + $0x28] sm:$0xff]
    %v1197 = vld [vmem:[%s1190 + $0x30] sm:$0xff]
    %v1198 = vld [vmem:[%s1190 + $0x38] sm:$0xff]
    %v1200 = vsel %vm178, %v1189, 0
    %1202 = vmatpush.msra.mxu0 0.0
    %1203 = vmatpush.msra.mxu0 0.0
    %1204 = vmatpush.msra.mxu0 0.0
    %1205 = vmatpush.msra.mxu0 0.0
    %1206 = vmatpush.msra.mxu0 0.0
    %1207 = vmatpush.msra.mxu0 0.0
    %1208 = vmatpush.msra.mxu0 0.0
    %1209 = vmatpush.msra.mxu0 0.0
    %1210 = vmatpush.msra.mxu0 %v1198
    %1211 = vmatpush.msra.mxu0 %v1197
    %1212 = vmatpush.msra.mxu0 %v1196
    %1213 = vmatpush.msra.mxu0 %v1195
    %1214 = vmatpush.msra.mxu0 %v1194
    %1215 = vmatpush.msra.mxu0 %v1193
    %1216 = vmatpush.msra.mxu0 %v1192
    %1217 = vmatpush.msra.mxu0 %v1191
    %1218 = vmatmul.f32.gmra.mxu0 %v1200
    %v1219 = vpop.f32.mrf.mxu0
    %v1220 = vadd.f32 0.0, %v1219
    %1221 = vdwg.mxu0
    %v1223 = vsel %vm178, %v1176, 0
    %1225 = vmatpush.msra.mxu0 0.0
    %1226 = vmatpush.msra.mxu0 0.0
    %1227 = vmatpush.msra.mxu0 0.0
    %1228 = vmatpush.msra.mxu0 0.0
    %1229 = vmatpush.msra.mxu0 0.0
    %1230 = vmatpush.msra.mxu0 0.0
    %1231 = vmatpush.msra.mxu0 0.0
    %1232 = vmatpush.msra.mxu0 0.0
    %1233 = vmatpush.msra.mxu0 %v1184
    %1234 = vmatpush.msra.mxu0 %v1183
    %1235 = vmatpush.msra.mxu0 %v1182
    %1236 = vmatpush.msra.mxu0 %v1181
    %1237 = vmatpush.msra.mxu0 %v1180
    %1238 = vmatpush.msra.mxu0 %v1179
    %1239 = vmatpush.msra.mxu0 %v1178
    %1240 = vmatpush.msra.mxu0 %v1177
    %1241 = vmatmul.f32.gmra.mxu0 %v1223
    %v1242 = vpop.f32.mrf.mxu0
    %v1243 = vadd.f32 %v1220, %v1242
    %1244 = vdwg.mxu0
    %v1245 = vld [vmem:[#allocation2 + $0x2] sm:$0xff]
    %s1246 = scalar_lea.vmem %s7, 128
    %v1247 = vld [vmem:[%s1246] sm:$0xff]
    %v1248 = vld [vmem:[%s1246 + $0x8] sm:$0xff]
    %v1249 = vld [vmem:[%s1246 + $0x10] sm:$0xff]
    %v1250 = vld [vmem:[%s1246 + $0x18] sm:$0xff]
    %v1251 = vld [vmem:[%s1246 + $0x20] sm:$0xff]
    %v1252 = vld [vmem:[%s1246 + $0x28] sm:$0xff]
    %v1253 = vld [vmem:[%s1246 + $0x30] sm:$0xff]
    %v1254 = vld [vmem:[%s1246 + $0x38] sm:$0xff]
    %v1256 = vsel %vm178, %v1245, 0
    %1258 = vmatpush.msra.mxu0 0.0
    %1259 = vmatpush.msra.mxu0 0.0
    %1260 = vmatpush.msra.mxu0 0.0
    %1261 = vmatpush.msra.mxu0 0.0
    %1262 = vmatpush.msra.mxu0 0.0
    %1263 = vmatpush.msra.mxu0 0.0
    %1264 = vmatpush.msra.mxu0 0.0
    %1265 = vmatpush.msra.mxu0 0.0
    %1266 = vmatpush.msra.mxu0 %v1254
    %1267 = vmatpush.msra.mxu0 %v1253
    %1268 = vmatpush.msra.mxu0 %v1252
    %1269 = vmatpush.msra.mxu0 %v1251
    %1270 = vmatpush.msra.mxu0 %v1250
    %1271 = vmatpush.msra.mxu0 %v1249
    %1272 = vmatpush.msra.mxu0 %v1248
    %1273 = vmatpush.msra.mxu0 %v1247
    %1274 = vmatmul.f32.gmra.mxu0 %v1256
    %v1275 = vpop.f32.mrf.mxu0
    %v1276 = vadd.f32 0.0, %v1275
    %1277 = vdwg.mxu0
    %v1278 = vadd.f32 %v1243, %v1276
    %v1279 = vld [vmem:[%s8] sm:$0x1]
    %v1281 = vperm.slane %v1279, 0
    %v1283 = vadd.f32 %v1278, %v1281
    %v1284 = vmax.f32 %v1283, 0.0
    %1285 = vst.msk [vmem:[#allocation2 + $0x2] sm:$0xff] %vm178, %v1284
    %v1286 = vld [vmem:[#allocation2] sm:$0xff]
    %v1287 = vsel %vm1175, %v1286, 0.0
    %v1288 = vld [vmem:[#allocation5] sm:$0xff]
    %v1289 = vld [vmem:[#allocation5 + $0x8] sm:$0xff]
    %v1290 = vld [vmem:[#allocation5 + $0x10] sm:$0xff]
    %v1291 = vld [vmem:[#allocation5 + $0x18] sm:$0xff]
    %v1292 = vld [vmem:[#allocation5 + $0x20] sm:$0xff]
    %v1293 = vld [vmem:[#allocation5 + $0x28] sm:$0xff]
    %v1294 = vld [vmem:[#allocation5 + $0x30] sm:$0xff]
    %v1295 = vld [vmem:[#allocation5 + $0x38] sm:$0xff]
    %v1296 = vld [vmem:[#allocation2 + $0x1] sm:$0xff]
    %v1297 = vsel %vm1188, %v1296, 0.0
    %s1298 = scalar_lea.vmem [#allocation5], 64
    %v1299 = vld [vmem:[%s1298] sm:$0xff]
    %v1300 = vld [vmem:[%s1298 + $0x8] sm:$0xff]
    %v1301 = vld [vmem:[%s1298 + $0x10] sm:$0xff]
    %v1302 = vld [vmem:[%s1298 + $0x18] sm:$0xff]
    %v1303 = vld [vmem:[%s1298 + $0x20] sm:$0xff]
    %v1304 = vld [vmem:[%s1298 + $0x28] sm:$0xff]
    %v1305 = vld [vmem:[%s1298 + $0x30] sm:$0xff]
    %v1306 = vld [vmem:[%s1298 + $0x38] sm:$0xff]
    %v1308 = vsel %vm178, %v1297, 0
    %1310 = vmatpush.msra.mxu0 0.0
    %1311 = vmatpush.msra.mxu0 0.0
    %1312 = vmatpush.msra.mxu0 0.0
    %1313 = vmatpush.msra.mxu0 0.0
    %1314 = vmatpush.msra.mxu0 0.0
    %1315 = vmatpush.msra.mxu0 0.0
    %1316 = vmatpush.msra.mxu0 0.0
    %1317 = vmatpush.msra.mxu0 0.0
    %1318 = vmatpush.msra.mxu0 %v1306
    %1319 = vmatpush.msra.mxu0 %v1305
    %1320 = vmatpush.msra.mxu0 %v1304
    %1321 = vmatpush.msra.mxu0 %v1303
    %1322 = vmatpush.msra.mxu0 %v1302
    %1323 = vmatpush.msra.mxu0 %v1301
    %1324 = vmatpush.msra.mxu0 %v1300
    %1325 = vmatpush.msra.mxu0 %v1299
    %1326 = vmatmul.f32.gmra.mxu0 %v1308
    %v1327 = vpop.f32.mrf.mxu0
    %v1328 = vadd.f32 0.0, %v1327
    %1329 = vdwg.mxu0
    %v1331 = vsel %vm178, %v1287, 0
    %1333 = vmatpush.msra.mxu0 0.0
    %1334 = vmatpush.msra.mxu0 0.0
    %1335 = vmatpush.msra.mxu0 0.0
    %1336 = vmatpush.msra.mxu0 0.0
    %1337 = vmatpush.msra.mxu0 0.0
    %1338 = vmatpush.msra.mxu0 0.0
    %1339 = vmatpush.msra.mxu0 0.0
    %1340 = vmatpush.msra.mxu0 0.0
    %1341 = vmatpush.msra.mxu0 %v1295
    %1342 = vmatpush.msra.mxu0 %v1294
    %1343 = vmatpush.msra.mxu0 %v1293
    %1344 = vmatpush.msra.mxu0 %v1292
    %1345 = vmatpush.msra.mxu0 %v1291
    %1346 = vmatpush.msra.mxu0 %v1290
    %1347 = vmatpush.msra.mxu0 %v1289
    %1348 = vmatpush.msra.mxu0 %v1288
    %1349 = vmatmul.f32.gmra.mxu0 %v1331
    %v1350 = vpop.f32.mrf.mxu0
    %v1351 = vadd.f32 %v1328, %v1350
    %1352 = vdwg.mxu0
    %v1353 = vld [vmem:[#allocation2 + $0x2] sm:$0xff]
    %s1354 = scalar_lea.vmem [#allocation5], 128
    %v1355 = vld [vmem:[%s1354] sm:$0xff]
    %v1356 = vld [vmem:[%s1354 + $0x8] sm:$0xff]
    %v1357 = vld [vmem:[%s1354 + $0x10] sm:$0xff]
    %v1358 = vld [vmem:[%s1354 + $0x18] sm:$0xff]
    %v1359 = vld [vmem:[%s1354 + $0x20] sm:$0xff]
    %v1360 = vld [vmem:[%s1354 + $0x28] sm:$0xff]
    %v1361 = vld [vmem:[%s1354 + $0x30] sm:$0xff]
    %v1362 = vld [vmem:[%s1354 + $0x38] sm:$0xff]
    %v1364 = vsel %vm178, %v1353, 0
    %1366 = vmatpush.msra.mxu0 0.0
    %1367 = vmatpush.msra.mxu0 0.0
    %1368 = vmatpush.msra.mxu0 0.0
    %1369 = vmatpush.msra.mxu0 0.0
    %1370 = vmatpush.msra.mxu0 0.0
    %1371 = vmatpush.msra.mxu0 0.0
    %1372 = vmatpush.msra.mxu0 0.0
    %1373 = vmatpush.msra.mxu0 0.0
    %1374 = vmatpush.msra.mxu0 %v1362
    %1375 = vmatpush.msra.mxu0 %v1361
    %1376 = vmatpush.msra.mxu0 %v1360
    %1377 = vmatpush.msra.mxu0 %v1359
    %1378 = vmatpush.msra.mxu0 %v1358
    %1379 = vmatpush.msra.mxu0 %v1357
    %1380 = vmatpush.msra.mxu0 %v1356
    %1381 = vmatpush.msra.mxu0 %v1355
    %1382 = vmatmul.f32.gmra.mxu0 %v1364
    %v1383 = vpop.f32.mrf.mxu0
    %v1384 = vadd.f32 0.0, %v1383
    %1385 = vdwg.mxu0
    %v1386 = vadd.f32 %v1351, %v1384
    %v1387 = vld [vmem:[%s10] sm:$0x1]
    %v1389 = vperm.slane %v1387, 0
    %v1391 = vadd.f32 %v1386, %v1389
    %v1392 = vmax.f32 %v1391, 0.0
    %v1393 = vadd.f32 %v1392, %v1154
    %v1394 = vmax.f32 %v1393, 0.0
    %v1395 = vlaneseq
    %v1396 = vand.u32 %v1395, 127
    %vm1397 = vcmp.eq.s32.totalorder %v1156, %v1396
    %v1398 = vsel %vm1397, 1, 0
    %v1399 = vcvt.s32.f32 %v1398
    %1400 = vxpose.xlu0.b32.start [1/16] %v1394, 128
    %1401 = vxpose.xlu0.b32.cont [2/16] 0.0, 128
    %1402 = vxpose.xlu0.b32.cont [3/16] 0.0, 128
    %1403 = vxpose.xlu0.b32.cont [4/16] 0.0, 128
    %1404 = vxpose.xlu0.b32.cont [5/16] 0.0, 128
    %1405 = vxpose.xlu0.b32.cont [6/16] 0.0, 128
    %1406 = vxpose.xlu0.b32.cont [7/16] 0.0, 128
    %1407 = vxpose.xlu0.b32.cont [8/16] 0.0, 128
    %1408 = vxpose.xlu0.b32.cont [9/16] 0.0, 128
    %1409 = vxpose.xlu0.b32.cont [10/16] 0.0, 128
    %1410 = vxpose.xlu0.b32.cont [11/16] 0.0, 128
    %1411 = vxpose.xlu0.b32.cont [12/16] 0.0, 128
    %1412 = vxpose.xlu0.b32.cont [13/16] 0.0, 128
    %1413 = vxpose.xlu0.b32.cont [14/16] 0.0, 128
    %1414 = vxpose.xlu0.b32.cont [15/16] 0.0, 128
    %1415 = vxpose.xlu0.b32.end [16/16] 0.0, 128
    %v1416 = vpop.trf.xlu0
    %v1417 = vpop.trf.xlu0
    %v1418 = vpop.trf.xlu0
    %v1419 = vpop.trf.xlu0
    %v1420 = vpop.trf.xlu0
    %v1421 = vpop.trf.xlu0
    %v1422 = vpop.trf.xlu0
    %v1423 = vpop.trf.xlu0
    %v1424 = vpop.trf.xlu0
    %v1425 = vpop.trf.xlu0
    %v1426 = vpop.trf.xlu0
    %v1427 = vpop.trf.xlu0
    %v1428 = vpop.trf.xlu0
    %v1429 = vpop.trf.xlu0
    %v1430 = vpop.trf.xlu0
    %v1431 = vpop.trf.xlu0
    %vm1432 = vcmask 64512
    %v1434 = vsel %vm1432, %v1416, 0
    %v1437 = vsel %vm1432, %v1417, 0
    %v1440 = vsel %vm1432, %v1418, 0
    %v1443 = vsel %vm1432, %v1419, 0
    %v1446 = vsel %vm1432, %v1420, 0
    %v1449 = vsel %vm1432, %v1421, 0
    %v1452 = vsel %vm1432, %v1422, 0
    %v1455 = vsel %vm1432, %v1423, 0
    %1457 = vmatpush.msra.mxu0 0.0
    %1458 = vmatpush.msra.mxu0 0.0
    %1459 = vmatpush.msra.mxu0 0.0
    %1460 = vmatpush.msra.mxu0 0.0
    %1461 = vmatpush.msra.mxu0 0.0
    %1462 = vmatpush.msra.mxu0 0.0
    %1463 = vmatpush.msra.mxu0 0.0
    %1464 = vmatpush.msra.mxu0 0.0
    %1465 = vmatpush.msra.mxu0 0.0
    %1466 = vmatpush.msra.mxu0 0.0
    %1467 = vmatpush.msra.mxu0 0.0
    %1468 = vmatpush.msra.mxu0 0.0
    %1469 = vmatpush.msra.mxu0 0.0
    %1470 = vmatpush.msra.mxu0 0.0
    %1471 = vmatpush.msra.mxu0 0.0
    %1472 = vmatpush.msra.mxu0 %v1399
    %1473 = vmatmul.f32.gmra.mxu0 %v1434
    %v1474 = vpop.f32.mrf.mxu0
    %v1475 = vadd.f32 0.0, %v1474
    %1476 = vmatmul.f32.gmra.mxu0 %v1437
    %v1477 = vpop.f32.mrf.mxu0
    %v1478 = vadd.f32 0.0, %v1477
    %1479 = vmatmul.f32.gmra.mxu0 %v1440
    %v1480 = vpop.f32.mrf.mxu0
    %v1481 = vadd.f32 0.0, %v1480
    %1482 = vmatmul.f32.gmra.mxu0 %v1443
    %v1483 = vpop.f32.mrf.mxu0
    %v1484 = vadd.f32 0.0, %v1483
    %1485 = vmatmul.f32.gmra.mxu0 %v1446
    %v1486 = vpop.f32.mrf.mxu0
    %v1487 = vadd.f32 0.0, %v1486
    %1488 = vmatmul.f32.gmra.mxu0 %v1449
    %v1489 = vpop.f32.mrf.mxu0
    %v1490 = vadd.f32 0.0, %v1489
    %1491 = vmatmul.f32.gmra.mxu0 %v1452
    %v1492 = vpop.f32.mrf.mxu0
    %v1493 = vadd.f32 0.0, %v1492
    %1494 = vmatmul.f32.gmra.mxu0 %v1455
    %v1495 = vpop.f32.mrf.mxu0
    %v1496 = vadd.f32 0.0, %v1495
    %1497 = vdwg.mxu0
    %vm1498 = vcmask 31744
    %1499 = vst.msk [vmem:[%s11] sm:$0xff] %vm1498, %v1475
    %1500 = vst.msk [vmem:[%s11 + $0x8] sm:$0xff] %vm1498, %v1478
    %1501 = vst.msk [vmem:[%s11 + $0x10] sm:$0xff] %vm1498, %v1481
    %1502 = vst.msk [vmem:[%s11 + $0x18] sm:$0xff] %vm1498, %v1484
    %1503 = vst.msk [vmem:[%s11 + $0x20] sm:$0xff] %vm1498, %v1487
    %1504 = vst.msk [vmem:[%s11 + $0x28] sm:$0xff] %vm1498, %v1490
    %1505 = vst.msk [vmem:[%s11 + $0x30] sm:$0xff] %vm1498, %v1493
    %1506 = vst.msk [vmem:[%s11 + $0x38] sm:$0xff] %vm1498, %v1496
    %1515 = vrot.lane.b32.xlu0 %v1475, 124
    %v1516 = vpop.permute.xlu0 %1515
    %1517 = vrot.lane.b32.xlu0 %v1478, 124
    %v1518 = vpop.permute.xlu0 %1517
    %1519 = vrot.lane.b32.xlu0 %v1481, 124
    %v1520 = vpop.permute.xlu0 %1519
    %1521 = vrot.lane.b32.xlu0 %v1484, 124
    %v1522 = vpop.permute.xlu0 %1521
    %1523 = vrot.lane.b32.xlu0 %v1487, 124
    %v1524 = vpop.permute.xlu0 %1523
    %1525 = vrot.lane.b32.xlu0 %v1490, 124
    %v1526 = vpop.permute.xlu0 %1525
    %1527 = vrot.lane.b32.xlu0 %v1493, 124
    %v1528 = vpop.permute.xlu0 %1527
    %1529 = vrot.lane.b32.xlu0 %v1496, 124
    %v1530 = vpop.permute.xlu0 %1529
    %s1539 = scalar_lea.vmem %s11, 64
    %1540 = vst.msk [vmem:[%s1539] sm:$0xff] %vm1498, %v1516
    %1541 = vst.msk [vmem:[%s1539 + $0x8] sm:$0xff] %vm1498, %v1518
    %1542 = vst.msk [vmem:[%s1539 + $0x10] sm:$0xff] %vm1498, %v1520
    %1543 = vst.msk [vmem:[%s1539 + $0x18] sm:$0xff] %vm1498, %v1522
    %1544 = vst.msk [vmem:[%s1539 + $0x20] sm:$0xff] %vm1498, %v1524
    %1545 = vst.msk [vmem:[%s1539 + $0x28] sm:$0xff] %vm1498, %v1526
    %1546 = vst.msk [vmem:[%s1539 + $0x30] sm:$0xff] %vm1498, %v1528
    %1547 = vst.msk [vmem:[%s1539 + $0x38] sm:$0xff] %vm1498, %v1530
    // Predicated region
    $region54: #{cnn_tcn_forward.1} parent=1 // pred_check
      _
    $region55: #{cnn_tcn_forward.1} parent=1 // pred_check_branch
      %1549 = sbr.rel (0) target = $region57
    $region56: #{cnn_tcn_forward.1} parent=1 // pred_region
      _
    $region57: #{cnn_tcn_forward.1} parent=1 // pred_fallthru
      _
    // Predicated region
    $region58: #{cnn_tcn_forward.1} parent=1 // pred_check
      _
    $region59: #{cnn_tcn_forward.1} parent=1 // pred_check_branch
      %1551 = sbr.rel (0) target = $region61
    $region60: #{cnn_tcn_forward.1} parent=1 // pred_region
      _
    $region61: #{cnn_tcn_forward.1} parent=1 // pred_fallthru
      _
    %1552 = vsyncpa [#allocation4], 1
    %1553 = vsyncpa [#allocation6], 1

</llo_original>
